<compile_context>
chip_gen: v6e
topology: v6e:2x2x1
jax: 0.10.0
libtpu: 0.0.40
codegen_flags: <defaults>
</compile_context>

<pallas_src>
import functools

import jax
import jax.numpy as jnp
import numpy as np
from jax.experimental import pallas as pl
from jax.experimental.pallas import tpu as pltpu

BN_EPS = 1e-5


# --------------------------------------------------------------------------
# Kernel 1: 3x3 conv as 9 accumulated MXU matmuls + fused BN partial stats.
# --------------------------------------------------------------------------
def _conv_stats_kernel(x_ref, w_ref, m_ref, y_ref, s_ref, *, H, W):
    """
    x_ref: (1, Cin, Pe)   zero-extended flat image, Pe = H*W + 2*(W+1)
    w_ref: (9, Cout, Cin) per-tap weight matrices, tap index = kh*3 + kw
    m_ref: (9, P)         per-tap validity masks (row-wrap handling)
    y_ref: (1, Cout, P)   conv output, channel-major, P = H*W on lanes
    s_ref: (1, Cout, 2)   per-image [sum, sum-of-squares] per channel
    """
    P = H * W
    cout = w_ref.shape[1]
    acc = jnp.zeros((cout, P), jnp.float32)
    for kh in range(3):
        for kw in range(3):
            t = kh * 3 + kw
            off = (kh - 1) * W + (kw - 1)
            start = (W + 1) + off                  # static, in [0, 2*(W+1)]
            xs = x_ref[0, :, start:start + P]      # (Cin, P) shifted view
            xs = xs * m_ref[t:t + 1, :]            # zero the wrapped columns
            acc = acc + jnp.dot(w_ref[t], xs,
                                preferred_element_type=jnp.float32)
    y_ref[0] = acc
    s_ref[0, :, 0:1] = jnp.sum(acc, axis=1, keepdims=True)
    s_ref[0, :, 1:2] = jnp.sum(acc * acc, axis=1, keepdims=True)


# --------------------------------------------------------------------------
# Kernel 2: streaming BatchNorm apply (precomputed scale/shift) + ReLU.
# --------------------------------------------------------------------------
def _bn_relu_kernel(y_ref, scale_ref, shift_ref, o_ref):
    # y_ref/o_ref: (1, Cout, P); scale/shift: (Cout, 1). Lane-dense apply.
    y = y_ref[0]
    o_ref[0] = jnp.maximum(y * scale_ref[...] + shift_ref[...], 0.0)


# --------------------------------------------------------------------------
# Wrapper: NCHW in / NCHW out.
# --------------------------------------------------------------------------
@jax.jit
def block_forward(x_nchw, conv_w, conv_b, gamma, beta):
    """x_nchw: (N, Cin, H, W); conv_w: (Cout, Cin, 3, 3); conv_b/gamma/beta: (Cout,)."""
    N, Cin, H, W = x_nchw.shape
    Cout = conv_w.shape[0]
    P = H * W
    pad = W + 1
    Pe = P + 2 * pad

    # Conv bias is mathematically cancelled by the training-mode BatchNorm
    # that follows (per-channel constant disappears in y - mean), so skip it.
    del conv_b

    # Flatten spatial dims onto the lane axis; zero-extend by (W+1) per side so
    # every 3x3 tap becomes a static lane slice of length P inside the kernel.
    x_flat = x_nchw.astype(jnp.float32).reshape(N, Cin, P)
    x_ext = jnp.pad(x_flat, ((0, 0), (0, 0), (pad, pad)))

    # Per-tap validity masks (trace-time constants).
    pp = np.arange(P)
    hh, ww = pp // W, pp % W
    mask_rows = []
    for kh in range(3):
        for kw in range(3):
            dh, dw = kh - 1, kw - 1
            valid = ((hh + dh >= 0) & (hh + dh < H) &
                     (ww + dw >= 0) & (ww + dw < W))
            mask_rows.append(valid.astype(np.float32))
    masks = jnp.asarray(np.stack(mask_rows, axis=0))          # (9, P)

    # (Cout, Cin, 3, 3) -> (9, Cout, Cin), tap index = kh*3 + kw.
    w_taps = jnp.transpose(conv_w.astype(jnp.float32),
                           (2, 3, 0, 1)).reshape(9, Cout, Cin)

    # Kernel 1: conv + fused BN partial statistics, one image per grid step.
    # (For much larger H*W, additionally tile the P axis; at these sizes one
    #  (Cout, P) block is a few KB of VMEM.)
    y, stats = pl.pallas_call(
        functools.partial(_conv_stats_kernel, H=H, W=W),
        out_shape=(jax.ShapeDtypeStruct((N, Cout, P), jnp.float32),
                   jax.ShapeDtypeStruct((N, Cout, 2), jnp.float32)),
        grid_spec=pltpu.PrefetchScalarGridSpec(
            num_scalar_prefetch=0,
            grid=(N,),
            in_specs=[
                pl.BlockSpec((1, Cin, Pe), lambda n: (n, 0, 0)),
                pl.BlockSpec((9, Cout, Cin), lambda n: (0, 0, 0)),
                pl.BlockSpec((9, P), lambda n: (0, 0)),
            ],
            out_specs=[
                pl.BlockSpec((1, Cout, P), lambda n: (n, 0, 0)),
                pl.BlockSpec((1, Cout, 2), lambda n: (n, 0, 0)),
            ],
        ),
        compiler_params=pltpu.CompilerParams(
            dimension_semantics=("parallel",)),
    )(x_ext, w_taps, masks)

    # Tiny per-channel reduction + BN coefficient math (Cout-sized glue only).
    s = jnp.sum(stats, axis=0)                                # (Cout, 2)
    m = float(N * P)
    mean = s[:, 0] / m
    var = jnp.maximum(s[:, 1] / m - mean * mean, 0.0)         # biased, clamped
    scale = gamma.astype(jnp.float32) * jax.lax.rsqrt(var + BN_EPS)
    shift = beta.astype(jnp.float32) - mean * scale

    # Kernel 2: streaming BN apply + ReLU, lane-dense, parallel over images.
    out = pl.pallas_call(
        _bn_relu_kernel,
        out_shape=jax.ShapeDtypeStruct((N, Cout, P), jnp.float32),
        grid_spec=pltpu.PrefetchScalarGridSpec(
            num_scalar_prefetch=0,
            grid=(N,),
            in_specs=[
                pl.BlockSpec((1, Cout, P), lambda n: (n, 0, 0)),
                pl.BlockSpec((Cout, 1), lambda n: (0, 0)),
                pl.BlockSpec((Cout, 1), lambda n: (0, 0)),
            ],
            out_specs=pl.BlockSpec((1, Cout, P), lambda n: (n, 0, 0)),
        ),
        compiler_params=pltpu.CompilerParams(
            dimension_semantics=("parallel",)),
    )(y, scale.reshape(Cout, 1), shift.reshape(Cout, 1))

    # (N, Cout, H*W) is already NCHW-contiguous: reshape only, no transpose.
    return out.reshape(N, Cout, H, W)


# --------------------------------------------------------------------------
# Pure-JAX reference (matches the PyTorch forward in training mode)
# --------------------------------------------------------------------------
def block_reference(x_nchw, conv_w, conv_b, gamma, beta):
    y = jax.lax.conv_general_dilated(
        x_nchw.astype(jnp.float32), conv_w.astype(jnp.float32),
        window_strides=(1, 1), padding=((1, 1), (1, 1)),
        dimension_numbers=("NCHW", "OIHW", "NCHW"))
    y = y + conv_b.reshape(1, -1, 1, 1)
    mean = jnp.mean(y, axis=(0, 2, 3), keepdims=True)
    var = jnp.mean((y - mean) ** 2, axis=(0, 2, 3), keepdims=True)  # biased
    y = (y - mean) * jax.lax.rsqrt(var + BN_EPS)
    y = y * gamma.reshape(1, -1, 1, 1) + beta.reshape(1, -1, 1, 1)
    return jnp.maximum(y, 0.0)


if __name__ == "__main__":
    # Small shapes consistent with the module: N=2, in_ch=4, out_ch=8, 16x16
    N, Cin, Cout, H, W = 2, 4, 8, 16, 16

    key = jax.random.PRNGKey(0)
    kx, kw, kb, kg, kbt = jax.random.split(key, 5)

    x = jax.random.normal(kx, (N, Cin, H, W), dtype=jnp.float32)
    fan_in = Cin * 3 * 3
    conv_w = jax.random.uniform(kw, (Cout, Cin, 3, 3), jnp.float32,
                                -1.0 / np.sqrt(fan_in), 1.0 / np.sqrt(fan_in))
    conv_b = jax.random.uniform(kb, (Cout,), jnp.float32,
                                -1.0 / np.sqrt(fan_in), 1.0 / np.sqrt(fan_in))
    gamma = 1.0 + 0.1 * jax.random.normal(kg, (Cout,), jnp.float32)
    beta = 0.1 * jax.random.normal(kbt, (Cout,), jnp.float32)

    out = block_forward(x, conv_w, conv_b, gamma, beta)
    out = jax.block_until_ready(out)

    ref = block_reference(x, conv_w, conv_b, gamma, beta)
    np.testing.assert_allclose(np.asarray(out), np.asarray(ref),
                               atol=1e-4, rtol=1e-4)
    print("KERNEL_OK")
</pallas_src>

<mosaic_0001>
module attributes {stable_mosaic.version = 11 : i64} {
  func.func @_conv_stats_kernel(%arg0: i32, %arg1: memref<1x4x290xf32, #tpu.memory_space<vmem>>, %arg2: memref<9x8x4xf32, #tpu.memory_space<vmem>>, %arg3: memref<9x256xf32, #tpu.memory_space<vmem>>, %arg4: memref<1x8x256xf32, #tpu.memory_space<vmem>>, %arg5: memref<1x8x2xf32, #tpu.memory_space<vmem>>) attributes {dimension_semantics = [#tpu.dimension_semantics<parallel>], iteration_bounds = array<i64: 2>, scalar_prefetch = 0 : i64, scratch_operands = 0 : i64, tpu.core_type = #tpu.core_type<tc>, window_params = [{transform_indices = @transform_0, window_bounds = array<i64: 1, 4, 290>}, {pipeline_mode = #tpu.pipeline_mode<synchronous>, transform_indices = @transform_1, window_bounds = array<i64: 9, 8, 4>}, {pipeline_mode = #tpu.pipeline_mode<synchronous>, transform_indices = @transform_2, window_bounds = array<i64: 9, 256>}, {transform_indices = @transform_3, window_bounds = array<i64: 1, 8, 256>}, {transform_indices = @transform_4, window_bounds = array<i64: 1, 8, 2>}]} {
    %cst = arith.constant 0.000000e+00 : f32
    %0 = vector.broadcast %cst : f32 to vector<8x256xf32>
    %c0 = arith.constant 0 : index
    %c0_0 = arith.constant 0 : index
    %c0_1 = arith.constant 0 : index
    %1 = vector.load %arg1[%c0, %c0_0, %c0_1] : memref<1x4x290xf32, #tpu.memory_space<vmem>>, vector<1x4x256xf32>
    %2 = vector.shape_cast %1 : vector<1x4x256xf32> to vector<4x256xf32>
    %c0_2 = arith.constant 0 : index
    %c0_3 = arith.constant 0 : index
    %3 = vector.load %arg3[%c0_2, %c0_3] : memref<9x256xf32, #tpu.memory_space<vmem>>, vector<1x256xf32>
    %4 = vector.broadcast %3 : vector<1x256xf32> to vector<4x256xf32>
    %5 = arith.mulf %2, %4 : vector<4x256xf32>
    %c0_4 = arith.constant 0 : index
    %c0_5 = arith.constant 0 : index
    %c0_6 = arith.constant 0 : index
    %6 = vector.load %arg2[%c0_4, %c0_5, %c0_6] : memref<9x8x4xf32, #tpu.memory_space<vmem>>, vector<1x8x4xf32>
    %7 = vector.shape_cast %6 : vector<1x8x4xf32> to vector<8x4xf32>
    %cst_7 = arith.constant dense<0.000000e+00> : vector<8x256xf32>
    %8 = tpu.matmul %7, %5, %cst_7 {dimension_numbers = #tpu.dot_dimension_numbers<[1], [0], [0], [1], [0, 0, 1, 1], [], []>} : vector<8x4xf32>, vector<4x256xf32>, vector<8x256xf32> -> vector<8x256xf32>
    %9 = arith.addf %0, %8 : vector<8x256xf32>
    %c0_8 = arith.constant 0 : index
    %c0_9 = arith.constant 0 : index
    %c1 = arith.constant 1 : index
    %10 = vector.load %arg1[%c0_8, %c0_9, %c1] : memref<1x4x290xf32, #tpu.memory_space<vmem>>, vector<1x4x256xf32>
    %11 = vector.shape_cast %10 : vector<1x4x256xf32> to vector<4x256xf32>
    %c1_10 = arith.constant 1 : index
    %c0_11 = arith.constant 0 : index
    %12 = vector.load %arg3[%c1_10, %c0_11] : memref<9x256xf32, #tpu.memory_space<vmem>>, vector<1x256xf32>
    %13 = vector.broadcast %12 : vector<1x256xf32> to vector<4x256xf32>
    %14 = arith.mulf %11, %13 : vector<4x256xf32>
    %c1_12 = arith.constant 1 : index
    %c0_13 = arith.constant 0 : index
    %c0_14 = arith.constant 0 : index
    %15 = vector.load %arg2[%c1_12, %c0_13, %c0_14] : memref<9x8x4xf32, #tpu.memory_space<vmem>>, vector<1x8x4xf32>
    %16 = vector.shape_cast %15 : vector<1x8x4xf32> to vector<8x4xf32>
    %cst_15 = arith.constant dense<0.000000e+00> : vector<8x256xf32>
    %17 = tpu.matmul %16, %14, %cst_15 {dimension_numbers = #tpu.dot_dimension_numbers<[1], [0], [0], [1], [0, 0, 1, 1], [], []>} : vector<8x4xf32>, vector<4x256xf32>, vector<8x256xf32> -> vector<8x256xf32>
    %18 = arith.addf %9, %17 : vector<8x256xf32>
    %c0_16 = arith.constant 0 : index
    %c0_17 = arith.constant 0 : index
    %c2 = arith.constant 2 : index
    %19 = vector.load %arg1[%c0_16, %c0_17, %c2] : memref<1x4x290xf32, #tpu.memory_space<vmem>>, vector<1x4x256xf32>
    %20 = vector.shape_cast %19 : vector<1x4x256xf32> to vector<4x256xf32>
    %c2_18 = arith.constant 2 : index
    %c0_19 = arith.constant 0 : index
    %21 = vector.load %arg3[%c2_18, %c0_19] : memref<9x256xf32, #tpu.memory_space<vmem>>, vector<1x256xf32>
    %22 = vector.broadcast %21 : vector<1x256xf32> to vector<4x256xf32>
    %23 = arith.mulf %20, %22 : vector<4x256xf32>
    %c2_20 = arith.constant 2 : index
    %c0_21 = arith.constant 0 : index
    %c0_22 = arith.constant 0 : index
    %24 = vector.load %arg2[%c2_20, %c0_21, %c0_22] : memref<9x8x4xf32, #tpu.memory_space<vmem>>, vector<1x8x4xf32>
    %25 = vector.shape_cast %24 : vector<1x8x4xf32> to vector<8x4xf32>
    %cst_23 = arith.constant dense<0.000000e+00> : vector<8x256xf32>
    %26 = tpu.matmul %25, %23, %cst_23 {dimension_numbers = #tpu.dot_dimension_numbers<[1], [0], [0], [1], [0, 0, 1, 1], [], []>} : vector<8x4xf32>, vector<4x256xf32>, vector<8x256xf32> -> vector<8x256xf32>
    %27 = arith.addf %18, %26 : vector<8x256xf32>
    %c0_24 = arith.constant 0 : index
    %c0_25 = arith.constant 0 : index
    %c16 = arith.constant 16 : index
    %28 = vector.load %arg1[%c0_24, %c0_25, %c16] : memref<1x4x290xf32, #tpu.memory_space<vmem>>, vector<1x4x256xf32>
    %29 = vector.shape_cast %28 : vector<1x4x256xf32> to vector<4x256xf32>
    %c3 = arith.constant 3 : index
    %c0_26 = arith.constant 0 : index
    %30 = vector.load %arg3[%c3, %c0_26] : memref<9x256xf32, #tpu.memory_space<vmem>>, vector<1x256xf32>
    %31 = vector.broadcast %30 : vector<1x256xf32> to vector<4x256xf32>
    %32 = arith.mulf %29, %31 : vector<4x256xf32>
    %c3_27 = arith.constant 3 : index
    %c0_28 = arith.constant 0 : index
    %c0_29 = arith.constant 0 : index
    %33 = vector.load %arg2[%c3_27, %c0_28, %c0_29] : memref<9x8x4xf32, #tpu.memory_space<vmem>>, vector<1x8x4xf32>
    %34 = vector.shape_cast %33 : vector<1x8x4xf32> to vector<8x4xf32>
    %cst_30 = arith.constant dense<0.000000e+00> : vector<8x256xf32>
    %35 = tpu.matmul %34, %32, %cst_30 {dimension_numbers = #tpu.dot_dimension_numbers<[1], [0], [0], [1], [0, 0, 1, 1], [], []>} : vector<8x4xf32>, vector<4x256xf32>, vector<8x256xf32> -> vector<8x256xf32>
    %36 = arith.addf %27, %35 : vector<8x256xf32>
    %c0_31 = arith.constant 0 : index
    %c0_32 = arith.constant 0 : index
    %c17 = arith.constant 17 : index
    %37 = vector.load %arg1[%c0_31, %c0_32, %c17] : memref<1x4x290xf32, #tpu.memory_space<vmem>>, vector<1x4x256xf32>
    %38 = vector.shape_cast %37 : vector<1x4x256xf32> to vector<4x256xf32>
    %c4 = arith.constant 4 : index
    %c0_33 = arith.constant 0 : index
    %39 = vector.load %arg3[%c4, %c0_33] : memref<9x256xf32, #tpu.memory_space<vmem>>, vector<1x256xf32>
    %40 = vector.broadcast %39 : vector<1x256xf32> to vector<4x256xf32>
    %41 = arith.mulf %38, %40 : vector<4x256xf32>
    %c4_34 = arith.constant 4 : index
    %c0_35 = arith.constant 0 : index
    %c0_36 = arith.constant 0 : index
    %42 = vector.load %arg2[%c4_34, %c0_35, %c0_36] : memref<9x8x4xf32, #tpu.memory_space<vmem>>, vector<1x8x4xf32>
    %43 = vector.shape_cast %42 : vector<1x8x4xf32> to vector<8x4xf32>
    %cst_37 = arith.constant dense<0.000000e+00> : vector<8x256xf32>
    %44 = tpu.matmul %43, %41, %cst_37 {dimension_numbers = #tpu.dot_dimension_numbers<[1], [0], [0], [1], [0, 0, 1, 1], [], []>} : vector<8x4xf32>, vector<4x256xf32>, vector<8x256xf32> -> vector<8x256xf32>
    %45 = arith.addf %36, %44 : vector<8x256xf32>
    %c0_38 = arith.constant 0 : index
    %c0_39 = arith.constant 0 : index
    %c18 = arith.constant 18 : index
    %46 = vector.load %arg1[%c0_38, %c0_39, %c18] : memref<1x4x290xf32, #tpu.memory_space<vmem>>, vector<1x4x256xf32>
    %47 = vector.shape_cast %46 : vector<1x4x256xf32> to vector<4x256xf32>
    %c5 = arith.constant 5 : index
    %c0_40 = arith.constant 0 : index
    %48 = vector.load %arg3[%c5, %c0_40] : memref<9x256xf32, #tpu.memory_space<vmem>>, vector<1x256xf32>
    %49 = vector.broadcast %48 : vector<1x256xf32> to vector<4x256xf32>
    %50 = arith.mulf %47, %49 : vector<4x256xf32>
    %c5_41 = arith.constant 5 : index
    %c0_42 = arith.constant 0 : index
    %c0_43 = arith.constant 0 : index
    %51 = vector.load %arg2[%c5_41, %c0_42, %c0_43] : memref<9x8x4xf32, #tpu.memory_space<vmem>>, vector<1x8x4xf32>
    %52 = vector.shape_cast %51 : vector<1x8x4xf32> to vector<8x4xf32>
    %cst_44 = arith.constant dense<0.000000e+00> : vector<8x256xf32>
    %53 = tpu.matmul %52, %50, %cst_44 {dimension_numbers = #tpu.dot_dimension_numbers<[1], [0], [0], [1], [0, 0, 1, 1], [], []>} : vector<8x4xf32>, vector<4x256xf32>, vector<8x256xf32> -> vector<8x256xf32>
    %54 = arith.addf %45, %53 : vector<8x256xf32>
    %c0_45 = arith.constant 0 : index
    %c0_46 = arith.constant 0 : index
    %c32 = arith.constant 32 : index
    %55 = vector.load %arg1[%c0_45, %c0_46, %c32] : memref<1x4x290xf32, #tpu.memory_space<vmem>>, vector<1x4x256xf32>
    %56 = vector.shape_cast %55 : vector<1x4x256xf32> to vector<4x256xf32>
    %c6 = arith.constant 6 : index
    %c0_47 = arith.constant 0 : index
    %57 = vector.load %arg3[%c6, %c0_47] : memref<9x256xf32, #tpu.memory_space<vmem>>, vector<1x256xf32>
    %58 = vector.broadcast %57 : vector<1x256xf32> to vector<4x256xf32>
    %59 = arith.mulf %56, %58 : vector<4x256xf32>
    %c6_48 = arith.constant 6 : index
    %c0_49 = arith.constant 0 : index
    %c0_50 = arith.constant 0 : index
    %60 = vector.load %arg2[%c6_48, %c0_49, %c0_50] : memref<9x8x4xf32, #tpu.memory_space<vmem>>, vector<1x8x4xf32>
    %61 = vector.shape_cast %60 : vector<1x8x4xf32> to vector<8x4xf32>
    %cst_51 = arith.constant dense<0.000000e+00> : vector<8x256xf32>
    %62 = tpu.matmul %61, %59, %cst_51 {dimension_numbers = #tpu.dot_dimension_numbers<[1], [0], [0], [1], [0, 0, 1, 1], [], []>} : vector<8x4xf32>, vector<4x256xf32>, vector<8x256xf32> -> vector<8x256xf32>
    %63 = arith.addf %54, %62 : vector<8x256xf32>
    %c0_52 = arith.constant 0 : index
    %c0_53 = arith.constant 0 : index
    %c33 = arith.constant 33 : index
    %64 = vector.load %arg1[%c0_52, %c0_53, %c33] : memref<1x4x290xf32, #tpu.memory_space<vmem>>, vector<1x4x256xf32>
    %65 = vector.shape_cast %64 : vector<1x4x256xf32> to vector<4x256xf32>
    %c7 = arith.constant 7 : index
    %c0_54 = arith.constant 0 : index
    %66 = vector.load %arg3[%c7, %c0_54] : memref<9x256xf32, #tpu.memory_space<vmem>>, vector<1x256xf32>
    %67 = vector.broadcast %66 : vector<1x256xf32> to vector<4x256xf32>
    %68 = arith.mulf %65, %67 : vector<4x256xf32>
    %c7_55 = arith.constant 7 : index
    %c0_56 = arith.constant 0 : index
    %c0_57 = arith.constant 0 : index
    %69 = vector.load %arg2[%c7_55, %c0_56, %c0_57] : memref<9x8x4xf32, #tpu.memory_space<vmem>>, vector<1x8x4xf32>
    %70 = vector.shape_cast %69 : vector<1x8x4xf32> to vector<8x4xf32>
    %cst_58 = arith.constant dense<0.000000e+00> : vector<8x256xf32>
    %71 = tpu.matmul %70, %68, %cst_58 {dimension_numbers = #tpu.dot_dimension_numbers<[1], [0], [0], [1], [0, 0, 1, 1], [], []>} : vector<8x4xf32>, vector<4x256xf32>, vector<8x256xf32> -> vector<8x256xf32>
    %72 = arith.addf %63, %71 : vector<8x256xf32>
    %c0_59 = arith.constant 0 : index
    %c0_60 = arith.constant 0 : index
    %c34 = arith.constant 34 : index
    %73 = vector.load %arg1[%c0_59, %c0_60, %c34] : memref<1x4x290xf32, #tpu.memory_space<vmem>>, vector<1x4x256xf32>
    %74 = vector.shape_cast %73 : vector<1x4x256xf32> to vector<4x256xf32>
    %c8 = arith.constant 8 : index
    %c0_61 = arith.constant 0 : index
    %75 = vector.load %arg3[%c8, %c0_61] : memref<9x256xf32, #tpu.memory_space<vmem>>, vector<1x256xf32>
    %76 = vector.broadcast %75 : vector<1x256xf32> to vector<4x256xf32>
    %77 = arith.mulf %74, %76 : vector<4x256xf32>
    %c8_62 = arith.constant 8 : index
    %c0_63 = arith.constant 0 : index
    %c0_64 = arith.constant 0 : index
    %78 = vector.load %arg2[%c8_62, %c0_63, %c0_64] : memref<9x8x4xf32, #tpu.memory_space<vmem>>, vector<1x8x4xf32>
    %79 = vector.shape_cast %78 : vector<1x8x4xf32> to vector<8x4xf32>
    %cst_65 = arith.constant dense<0.000000e+00> : vector<8x256xf32>
    %80 = tpu.matmul %79, %77, %cst_65 {dimension_numbers = #tpu.dot_dimension_numbers<[1], [0], [0], [1], [0, 0, 1, 1], [], []>} : vector<8x4xf32>, vector<4x256xf32>, vector<8x256xf32> -> vector<8x256xf32>
    %81 = arith.addf %72, %80 : vector<8x256xf32>
    %c0_66 = arith.constant 0 : index
    %c0_67 = arith.constant 0 : index
    %c0_68 = arith.constant 0 : index
    %82 = vector.load %arg4[%c0_66, %c0_67, %c0_68] : memref<1x8x256xf32, #tpu.memory_space<vmem>>, vector<1x8x256xf32>
    %83 = vector.shape_cast %82 : vector<1x8x256xf32> to vector<8x256xf32>
    %84 = vector.shape_cast %81 : vector<8x256xf32> to vector<1x8x256xf32>
    tpu.vector_store %arg4[%c0_66, %c0_67, %c0_68], %84 {strides = array<i32>} : memref<1x8x256xf32, #tpu.memory_space<vmem>>, vector<1x8x256xf32>,
    %cst_69 = arith.constant dense<0.000000e+00> : vector<8xf32>
    %85 = vector.multi_reduction <add>, %81, %cst_69 [1] : vector<8x256xf32> to vector<8xf32>
    %86 = vector.shape_cast %85 : vector<8xf32> to vector<8x1xf32>
    %c0_70 = arith.constant 0 : index
    %c0_71 = arith.constant 0 : index
    %c0_72 = arith.constant 0 : index
    %87 = vector.load %arg5[%c0_70, %c0_71, %c0_72] : memref<1x8x2xf32, #tpu.memory_space<vmem>>, vector<1x8x1xf32>
    %88 = vector.shape_cast %87 : vector<1x8x1xf32> to vector<8x1xf32>
    %89 = vector.shape_cast %86 : vector<8x1xf32> to vector<1x8x1xf32>
    tpu.vector_store %arg5[%c0_70, %c0_71, %c0_72], %89 {strides = array<i32>} : memref<1x8x2xf32, #tpu.memory_space<vmem>>, vector<1x8x1xf32>,
    %90 = arith.mulf %81, %81 : vector<8x256xf32>
    %cst_73 = arith.constant dense<0.000000e+00> : vector<8xf32>
    %91 = vector.multi_reduction <add>, %90, %cst_73 [1] : vector<8x256xf32> to vector<8xf32>
    %92 = vector.shape_cast %91 : vector<8xf32> to vector<8x1xf32>
    %c0_74 = arith.constant 0 : index
    %c0_75 = arith.constant 0 : index
    %c1_76 = arith.constant 1 : index
    %93 = vector.load %arg5[%c0_74, %c0_75, %c1_76] : memref<1x8x2xf32, #tpu.memory_space<vmem>>, vector<1x8x1xf32>
    %94 = vector.shape_cast %93 : vector<1x8x1xf32> to vector<8x1xf32>
    %95 = vector.shape_cast %92 : vector<8x1xf32> to vector<1x8x1xf32>
    tpu.vector_store %arg5[%c0_74, %c0_75, %c1_76], %95 {strides = array<i32>} : memref<1x8x2xf32, #tpu.memory_space<vmem>>, vector<1x8x1xf32>,
    return
  }
  func.func @transform_0(%arg0: i32) -> (i32, i32, i32) {
    %c0_i32 = arith.constant 0 : i32
    %c0_i32_0 = arith.constant 0 : i32
    %c0_i32_1 = arith.constant 0 : i32
    return %arg0, %c0_i32, %c0_i32_0 : i32, i32, i32
  }
  func.func @transform_1(%arg0: i32) -> (i32, i32, i32) {
    %c0_i32 = arith.constant 0 : i32
    %c0_i32_0 = arith.constant 0 : i32
    %c0_i32_1 = arith.constant 0 : i32
    %c0_i32_2 = arith.constant 0 : i32
    return %c0_i32, %c0_i32_0, %c0_i32_1 : i32, i32, i32
  }
  func.func @transform_2(%arg0: i32) -> (i32, i32) {
    %c0_i32 = arith.constant 0 : i32
    %c0_i32_0 = arith.constant 0 : i32
    %c0_i32_1 = arith.constant 0 : i32
    return %c0_i32, %c0_i32_0 : i32, i32
  }
  func.func @transform_3(%arg0: i32) -> (i32, i32, i32) {
    %c0_i32 = arith.constant 0 : i32
    %c0_i32_0 = arith.constant 0 : i32
    %c0_i32_1 = arith.constant 0 : i32
    return %arg0, %c0_i32, %c0_i32_0 : i32, i32, i32
  }
  func.func @transform_4(%arg0: i32) -> (i32, i32, i32) {
    %c0_i32 = arith.constant 0 : i32
    %c0_i32_0 = arith.constant 0 : i32
    %c0_i32_1 = arith.constant 0 : i32
    return %arg0, %c0_i32, %c0_i32_0 : i32, i32, i32
  }
}

module attributes {stable_mosaic.version = 11 : i64} {
  func.func @_bn_relu_kernel(%arg0: i32, %arg1: memref<1x8x256xf32, #tpu.memory_space<vmem>>, %arg2: memref<8x1xf32, #tpu.memory_space<vmem>>, %arg3: memref<8x1xf32, #tpu.memory_space<vmem>>, %arg4: memref<1x8x256xf32, #tpu.memory_space<vmem>>) attributes {dimension_semantics = [#tpu.dimension_semantics<parallel>], iteration_bounds = array<i64: 2>, scalar_prefetch = 0 : i64, scratch_operands = 0 : i64, tpu.core_type = #tpu.core_type<tc>, window_params = [{transform_indices = @transform_0, window_bounds = array<i64: 1, 8, 256>}, {pipeline_mode = #tpu.pipeline_mode<synchronous>, transform_indices = @transform_1, window_bounds = array<i64: 8, 1>}, {pipeline_mode = #tpu.pipeline_mode<synchronous>, transform_indices = @transform_2, window_bounds = array<i64: 8, 1>}, {transform_indices = @transform_3, window_bounds = array<i64: 1, 8, 256>}]} {
    %c0 = arith.constant 0 : index
    %c0_0 = arith.constant 0 : index
    %c0_1 = arith.constant 0 : index
    %0 = vector.load %arg1[%c0, %c0_0, %c0_1] : memref<1x8x256xf32, #tpu.memory_space<vmem>>, vector<1x8x256xf32>
    %1 = vector.shape_cast %0 : vector<1x8x256xf32> to vector<8x256xf32>
    %c0_2 = arith.constant 0 : index
    %c0_3 = arith.constant 0 : index
    %2 = vector.load %arg2[%c0_2, %c0_3] : memref<8x1xf32, #tpu.memory_space<vmem>>, vector<8x1xf32>
    %3 = vector.broadcast %2 : vector<8x1xf32> to vector<8x256xf32>
    %4 = arith.mulf %1, %3 : vector<8x256xf32>
    %c0_4 = arith.constant 0 : index
    %c0_5 = arith.constant 0 : index
    %5 = vector.load %arg3[%c0_4, %c0_5] : memref<8x1xf32, #tpu.memory_space<vmem>>, vector<8x1xf32>
    %6 = vector.broadcast %5 : vector<8x1xf32> to vector<8x256xf32>
    %7 = arith.addf %4, %6 : vector<8x256xf32>
    %cst = arith.constant 0.000000e+00 : f32
    %8 = vector.broadcast %cst : f32 to vector<8x256xf32>
    %9 = arith.maximumf %7, %8 : vector<8x256xf32>
    %c0_6 = arith.constant 0 : index
    %c0_7 = arith.constant 0 : index
    %c0_8 = arith.constant 0 : index
    %10 = vector.load %arg4[%c0_6, %c0_7, %c0_8] : memref<1x8x256xf32, #tpu.memory_space<vmem>>, vector<1x8x256xf32>
    %11 = vector.shape_cast %10 : vector<1x8x256xf32> to vector<8x256xf32>
    %12 = vector.shape_cast %9 : vector<8x256xf32> to vector<1x8x256xf32>
    tpu.vector_store %arg4[%c0_6, %c0_7, %c0_8], %12 {strides = array<i32>} : memref<1x8x256xf32, #tpu.memory_space<vmem>>, vector<1x8x256xf32>,
    return
  }
  func.func @transform_0(%arg0: i32) -> (i32, i32, i32) {
    %c0_i32 = arith.constant 0 : i32
    %c0_i32_0 = arith.constant 0 : i32
    %c0_i32_1 = arith.constant 0 : i32
    return %arg0, %c0_i32, %c0_i32_0 : i32, i32, i32
  }
  func.func @transform_1(%arg0: i32) -> (i32, i32) {
    %c0_i32 = arith.constant 0 : i32
    %c0_i32_0 = arith.constant 0 : i32
    %c0_i32_1 = arith.constant 0 : i32
    return %c0_i32, %c0_i32_0 : i32, i32
  }
  func.func @transform_2(%arg0: i32) -> (i32, i32) {
    %c0_i32 = arith.constant 0 : i32
    %c0_i32_0 = arith.constant 0 : i32
    %c0_i32_1 = arith.constant 0 : i32
    return %c0_i32, %c0_i32_0 : i32, i32
  }
  func.func @transform_3(%arg0: i32) -> (i32, i32, i32) {
    %c0_i32 = arith.constant 0 : i32
    %c0_i32_0 = arith.constant 0 : i32
    %c0_i32_1 = arith.constant 0 : i32
    return %arg0, %c0_i32, %c0_i32_0 : i32, i32, i32
  }
}

</mosaic_0001>

<llo_original>
// kernel: block_forward.3
$region0: #{block_forward.3}
  #allocation0 [shape = 'u32[]', space=smem, size = 0x4, offset = 0x4, fixed_abs, tag = 'smem constant byte address 0x4 - core index']
  #allocation1 [shape = 'u32[144,128]{1,0:T(1,128)}', space=vmem, size = 0x12000, scoped, tag = 'internal scratch']
  %s0 = inlined_call_operand.vmem [shape: f32[2,8,256], index: 0, kind: input, shape index: {}]
  %s1 = inlined_call_operand.vmem [shape: f32[8,1], index: 1, kind: input, shape index: {}]
  %s2 = inlined_call_operand.vmem [shape: f32[8,1], index: 2, kind: input, shape index: {}]
  %s3 = inlined_call_operand.vmem [shape: f32[2,8,256], index: 3, kind: output, shape index: {}]
  %s4 = sld [smem:[#allocation0]]
  $region45: #{block_forward.3} parent=0
    _
  %s6 = ssub.s32 1, %s4
  %s7 = scalar_select 0, %s6, %s4
  loop: start=0, step=1, limit=4
  $region2: #{block_forward.3} parent=0 // loop_pre_header
    _
  $region3: #{block_forward.3} parent=0 // loop_header
    %s9 = sphi 0, %s13
    %p10 = scmp.ge.s32.totalorder %s9, 4
    %s19 = sphi 0, %s21
    %s22 = sphi 0, %s19
    %s23 = sphi 0, %s22
    %s39 = sphi 0, %s23
    %s43 = sphi 0, %s43
    %s45 = sphi 0, %s43
    %s46 = sphi 0, %s45
    %s60 = sphi 0, %s46
    %s64 = sphi 0, %s64
    %s66 = sphi 0, %s64
    %s67 = sphi 0, %s66
    %s81 = sphi 0, %s67
    %s87 = sphi 0, %s89
    %s90 = sphi 0, %s87
    %s91 = sphi 0, %s90
    %s107 = sphi 0, %s91
  $region4: #{block_forward.3} parent=0 // loop_header_branch
    %12 = sbr.rel (%p10) target = $region8
  $region5: #{block_forward.3} parent=0 // loop_body
    %s14 = ssub.s32 %s9, 1
    %s15 = ssub.s32 %s9, 2
    %s16 = sadd.s32 %s9, 1
    %s17 = ssub.s32 %s9, %s16
    %p18 = scmp.eq.s32.totalorder %s17, 0
    %s20 = sadd.s32 %s19, 1
    %s21 = scalar_select %p18, %s19, %s20
    %p24 = pneg %p18
    %p25 = scmp.eq.s32.totalorder %s9, 1
    %p26 = por %p24, %p25
    %p27 = scmp.ne.s32.totalorder %s19, %s22
    %p28 = scmp.eq.s32.totalorder %s9, 0
    %p29 = por %p27, %p28
    %p30 = scmp.ne.s32.totalorder %s19, %s22
    %p31 = scmp.eq.s32.totalorder %s14, 1
    %p32 = por %p30, %p31
    %p33 = scmp.ne.s32.totalorder %s22, %s23
    %p34 = scmp.eq.s32.totalorder %s14, 0
    %p35 = por %p33, %p34
    %p36 = scmp.ne.s32.totalorder %s22, %s23
    %p37 = scmp.eq.s32.totalorder %s15, 1
    %p38 = por %p36, %p37
    %p40 = scmp.ne.s32.totalorder %s23, %s39
    %p41 = scmp.eq.s32.totalorder %s15, 0
    %p42 = por %p40, %p41
    %s44 = sadd.s32 %s43, 1
    %p47 = scmp.eq.s32.totalorder %s9, 1
    %p48 = scmp.ne.s32.totalorder %s43, %s45
    %p49 = scmp.eq.s32.totalorder %s9, 0
    %p50 = por %p48, %p49
    %p51 = scmp.ne.s32.totalorder %s43, %s45
    %p52 = scmp.eq.s32.totalorder %s14, 1
    %p53 = por %p51, %p52
    %p54 = scmp.ne.s32.totalorder %s45, %s46
    %p55 = scmp.eq.s32.totalorder %s14, 0
    %p56 = por %p54, %p55
    %p57 = scmp.ne.s32.totalorder %s45, %s46
    %p58 = scmp.eq.s32.totalorder %s15, 1
    %p59 = por %p57, %p58
    %p61 = scmp.ne.s32.totalorder %s46, %s60
    %p62 = scmp.eq.s32.totalorder %s15, 0
    %p63 = por %p61, %p62
    %s65 = sadd.s32 %s64, 1
    %p68 = scmp.eq.s32.totalorder %s9, 1
    %p69 = scmp.ne.s32.totalorder %s64, %s66
    %p70 = scmp.eq.s32.totalorder %s9, 0
    %p71 = por %p69, %p70
    %p72 = scmp.ne.s32.totalorder %s64, %s66
    %p73 = scmp.eq.s32.totalorder %s14, 1
    %p74 = por %p72, %p73
    %p75 = scmp.ne.s32.totalorder %s66, %s67
    %p76 = scmp.eq.s32.totalorder %s14, 0
    %p77 = por %p75, %p76
    %p78 = scmp.ne.s32.totalorder %s66, %s67
    %p79 = scmp.eq.s32.totalorder %s15, 1
    %p80 = por %p78, %p79
    %p82 = scmp.ne.s32.totalorder %s67, %s81
    %p83 = scmp.eq.s32.totalorder %s15, 0
    %p84 = por %p82, %p83
    %s85 = ssub.s32 %s9, %s16
    %p86 = scmp.eq.s32.totalorder %s85, 0
    %s88 = sadd.s32 %s87, 1
    %s89 = scalar_select %p86, %s87, %s88
    %p92 = pneg %p86
    %p93 = scmp.eq.s32.totalorder %s9, 1
    %p94 = por %p92, %p93
    %p95 = scmp.ne.s32.totalorder %s87, %s90
    %p96 = scmp.eq.s32.totalorder %s9, 0
    %p97 = por %p95, %p96
    %p98 = scmp.ne.s32.totalorder %s87, %s90
    %p99 = scmp.eq.s32.totalorder %s14, 1
    %p100 = por %p98, %p99
    %p101 = scmp.ne.s32.totalorder %s90, %s91
    %p102 = scmp.eq.s32.totalorder %s14, 0
    %p103 = por %p101, %p102
    %p104 = scmp.ne.s32.totalorder %s90, %s91
    %p105 = scmp.eq.s32.totalorder %s15, 1
    %p106 = por %p104, %p105
    %p108 = scmp.ne.s32.totalorder %s91, %s107
    %p109 = scmp.eq.s32.totalorder %s15, 0
    %p110 = por %p108, %p109
    %p111 = scmp.le.s32.totalorder 1, %s9
    %p112 = scmp.lt.s32.totalorder %s9, 3
    %p113 = pnand %p111, %p112
    %p114 = pneg %p113
    // Predicated region
    $region9: #{block_forward.3} parent=5 // pred_check
      _
    $region10: #{block_forward.3} parent=5 // pred_check_branch
      %116 = sbr.rel (%p113) target = $region12
    $region11: #{block_forward.3} parent=5 // pred_region
      %s117 = ssub.s32 %s9, 1
      // Predicated region
      $region13: #{block_forward.3} parent=11 // pred_check
        %p118 = pneg %p56
      $region14: #{block_forward.3} parent=11 // pred_check_branch
        %120 = sbr.rel (%p118) target = $region16
      $region15: #{block_forward.3} parent=11 // pred_region
        _
      $region16: #{block_forward.3} parent=11 // pred_fallthru
        _
      // Predicated region
      $region17: #{block_forward.3} parent=11 // pred_check
        %p121 = pneg %p77
      $region18: #{block_forward.3} parent=11 // pred_check_branch
        %123 = sbr.rel (%p121) target = $region20
      $region19: #{block_forward.3} parent=11 // pred_region
        _
      $region20: #{block_forward.3} parent=11 // pred_fallthru
        _
    $region12: #{block_forward.3} parent=5 // pred_fallthru
      _
    %p124 = scmp.lt.s32.totalorder %s9, 2
    // Predicated region
    $region21: #{block_forward.3} parent=5 // pred_check
      %p125 = pneg %p124
    $region22: #{block_forward.3} parent=5 // pred_check_branch
      %127 = sbr.rel (%p125) target = $region24
    $region23: #{block_forward.3} parent=5 // pred_region
      // Predicated region
      $region25: #{block_forward.3} parent=23 // pred_check
        %p128 = pneg %p29
      $region26: #{block_forward.3} parent=23 // pred_check_branch
        %130 = sbr.rel (%p128) target = $region28
      $region27: #{block_forward.3} parent=23 // pred_region
        %p131 = scmp.lt.s32.totalorder %s9, 1
        %s132 = scalar_select %p131, %s9, 1
        %s133 = smul.addr %s132, 2
        %s134 = smul.addr %s133, 8
        %s135 = scalar_lea.vmem %s0, %s134
      $region28: #{block_forward.3} parent=23 // pred_fallthru
        _
    $region24: #{block_forward.3} parent=5 // pred_fallthru
      _
    %p136 = scmp.le.s32.totalorder 1, %s9
    %p137 = scmp.lt.s32.totalorder %s9, 3
    %p138 = pnand %p136, %p137
    %p139 = pneg %p138
    // Predicated region
    $region29: #{block_forward.3} parent=5 // pred_check
      _
    $region30: #{block_forward.3} parent=5 // pred_check_branch
      %141 = sbr.rel (%p138) target = $region32
    $region31: #{block_forward.3} parent=5 // pred_region
      %s142 = ssub.s32 %s9, 1
      %p143 = scmp.lt.s32.totalorder %s14, 1
      %s144 = scalar_select %p143, %s14, 1
      %s145 = smul.addr %s144, 2
      %s146 = smul.addr %s145, 8
      %s147 = scalar_lea.vmem %s0, %s146
      %p148 = pneg %p35
      %p149 = pneg %p32
      %p150 = pneg %p56
      %p151 = pneg %p53
      %p152 = pneg %p77
      %p153 = pneg %p74
      %p154 = pneg %p103
      %p155 = pneg %p100
      %p156 = scmp.lt.s32.totalorder %s14, 1
      %s157 = scalar_select %p156, %s14, 1
      %s158 = smul.addr %s157, 2
      %s159 = smul.addr %s158, 8
      %s160 = scalar_lea.vmem %s3, %s159
      %p161 = scmp.lt.s32.totalorder %s14, 1
      %s162 = scalar_select %p161, %s14, 1
      %s163 = smul.addr %s162, 2
      %s164 = smul.addr %s163, 8
      %s165 = scalar_lea.vmem %s0, %s164
      %p166 = scmp.lt.s32.totalorder %s14, 1
      %s167 = scalar_select %p166, %s14, 1
      %s168 = smul.addr %s167, 2
      %s169 = smul.addr %s168, 8
      %s170 = scalar_lea.vmem %s3, %s169
      %v171 = vld [vmem:[%s165] sm:$0xff]
      %v172 = vld [vmem:[%s165 + $0x8] sm:$0xff]
      %v173 = vld [vmem:[%s1] sm:$0xff]
      %175 = vset.pattern.permute.xlu0 0
      %176 = vperm.xlu0 %175, %v173
      %v177 = vpop.permute.xlu0 %176
      %v179 = vmul.f32 %v171, %v177
      %v180 = vmul.f32 %v172, %v177
      %v181 = vld [vmem:[%s2] sm:$0xff]
      %183 = vset.pattern.permute.xlu0 0
      %184 = vperm.xlu0 %183, %v181
      %v185 = vpop.permute.xlu0 %184
      %v187 = vadd.f32 %v179, %v185
      %v188 = vadd.f32 %v180, %v185
      %v189 = vmax.f32 %v187, 0.0
      %v190 = vmax.f32 %v188, 0.0
      %191 = vst [vmem:[%s170] sm:$0xff] %v189
      %192 = vst [vmem:[%s170 + $0x8] sm:$0xff] %v190
      %p193 = scmp.lt.s32.totalorder %s14, 1
      %s194 = scalar_select %p193, %s14, 1
      %s195 = smul.addr %s194, 2
      %s196 = smul.addr %s195, 8
      %s197 = scalar_lea.vmem %s3, %s196
      // Predicated region
      $region33: #{block_forward.3} parent=31 // pred_check
        %p198 = pneg %p100
      $region34: #{block_forward.3} parent=31 // pred_check_branch
        %200 = sbr.rel (%p198) target = $region36
      $region35: #{block_forward.3} parent=31 // pred_region
        _
      $region36: #{block_forward.3} parent=31 // pred_fallthru
        _
    $region32: #{block_forward.3} parent=5 // pred_fallthru
      _
    %p201 = scmp.le.s32.totalorder 2, %s9
    // Predicated region
    $region37: #{block_forward.3} parent=5 // pred_check
      %p202 = pneg %p201
    $region38: #{block_forward.3} parent=5 // pred_check_branch
      %204 = sbr.rel (%p202) target = $region40
    $region39: #{block_forward.3} parent=5 // pred_region
      %s205 = ssub.s32 %s9, 2
      // Predicated region
      $region41: #{block_forward.3} parent=39 // pred_check
        %p206 = pneg %p106
      $region42: #{block_forward.3} parent=39 // pred_check_branch
        %208 = sbr.rel (%p206) target = $region44
      $region43: #{block_forward.3} parent=39 // pred_region
        %p209 = scmp.lt.s32.totalorder %s15, 1
        %s210 = scalar_select %p209, %s15, 1
        %s211 = smul.addr %s210, 2
        %s212 = smul.addr %s211, 8
        %s213 = scalar_lea.vmem %s3, %s212
      $region44: #{block_forward.3} parent=39 // pred_fallthru
        _
    $region40: #{block_forward.3} parent=5 // pred_fallthru
      _
  $region6: #{block_forward.3} parent=0 // loop_footer
    %s13 = sadd.s32 1, %s9
  $region7: #{block_forward.3} parent=0 // loop_footer_branch
    %8 = sbr.rel target = $region3
  $region8: #{block_forward.3} parent=0 // loop_exit
    _

// kernel: block_forward.2
$region0: #{block_forward.2}
  #allocation0 [shape = 'u32[]', space=smem, size = 0x4, offset = 0x4, fixed_abs, tag = 'smem constant byte address 0x4 - core index']
  #allocation1 [shape = 'u32[144,128]{1,0:T(1,128)}', space=vmem, size = 0x12000, scoped, tag = 'internal scratch']
  %s0 = inlined_call_operand.vmem [shape: f32[2,4,290], index: 0, kind: input, shape index: {}]
  %s1 = inlined_call_operand.vmem [shape: f32[9,8,4], index: 1, kind: input, shape index: {}]
  %s2 = inlined_call_operand.vmem [shape: f32[9,256], index: 2, kind: input, shape index: {}]
  %s3 = inlined_call_operand.vmem [shape: f32[2,8,256], index: 3, kind: output, shape index: {0}]
  %s4 = inlined_call_operand.vmem [shape: f32[2,8,2], index: 4, kind: output, shape index: {1}]
  %5 = xla_tuple %s3, %s4
  %s6 = sld [smem:[#allocation0]]
  $region53: #{block_forward.2} parent=0
    _
  %s8 = ssub.s32 1, %s6
  %s9 = scalar_select 0, %s8, %s6
  loop: start=0, step=1, limit=4
  $region2: #{block_forward.2} parent=0 // loop_pre_header
    _
  $region3: #{block_forward.2} parent=0 // loop_header
    %s11 = sphi 0, %s15
    %p12 = scmp.ge.s32.totalorder %s11, 4
    %s21 = sphi 0, %s23
    %s24 = sphi 0, %s21
    %s25 = sphi 0, %s24
    %s41 = sphi 0, %s25
    %s45 = sphi 0, %s45
    %s47 = sphi 0, %s45
    %s48 = sphi 0, %s47
    %s62 = sphi 0, %s48
    %s66 = sphi 0, %s66
    %s68 = sphi 0, %s66
    %s69 = sphi 0, %s68
    %s83 = sphi 0, %s69
    %s89 = sphi 0, %s91
    %s92 = sphi 0, %s89
    %s93 = sphi 0, %s92
    %s109 = sphi 0, %s93
    %s115 = sphi 0, %s117
    %s118 = sphi 0, %s115
    %s119 = sphi 0, %s118
    %s135 = sphi 0, %s119
  $region4: #{block_forward.2} parent=0 // loop_header_branch
    %14 = sbr.rel (%p12) target = $region8
  $region5: #{block_forward.2} parent=0 // loop_body
    %s16 = ssub.s32 %s11, 1
    %s17 = ssub.s32 %s11, 2
    %s18 = sadd.s32 %s11, 1
    %s19 = ssub.s32 %s11, %s18
    %p20 = scmp.eq.s32.totalorder %s19, 0
    %s22 = sadd.s32 %s21, 1
    %s23 = scalar_select %p20, %s21, %s22
    %p26 = pneg %p20
    %p27 = scmp.eq.s32.totalorder %s11, 1
    %p28 = por %p26, %p27
    %p29 = scmp.ne.s32.totalorder %s21, %s24
    %p30 = scmp.eq.s32.totalorder %s11, 0
    %p31 = por %p29, %p30
    %p32 = scmp.ne.s32.totalorder %s21, %s24
    %p33 = scmp.eq.s32.totalorder %s16, 1
    %p34 = por %p32, %p33
    %p35 = scmp.ne.s32.totalorder %s24, %s25
    %p36 = scmp.eq.s32.totalorder %s16, 0
    %p37 = por %p35, %p36
    %p38 = scmp.ne.s32.totalorder %s24, %s25
    %p39 = scmp.eq.s32.totalorder %s17, 1
    %p40 = por %p38, %p39
    %p42 = scmp.ne.s32.totalorder %s25, %s41
    %p43 = scmp.eq.s32.totalorder %s17, 0
    %p44 = por %p42, %p43
    %s46 = sadd.s32 %s45, 1
    %p49 = scmp.eq.s32.totalorder %s11, 1
    %p50 = scmp.ne.s32.totalorder %s45, %s47
    %p51 = scmp.eq.s32.totalorder %s11, 0
    %p52 = por %p50, %p51
    %p53 = scmp.ne.s32.totalorder %s45, %s47
    %p54 = scmp.eq.s32.totalorder %s16, 1
    %p55 = por %p53, %p54
    %p56 = scmp.ne.s32.totalorder %s47, %s48
    %p57 = scmp.eq.s32.totalorder %s16, 0
    %p58 = por %p56, %p57
    %p59 = scmp.ne.s32.totalorder %s47, %s48
    %p60 = scmp.eq.s32.totalorder %s17, 1
    %p61 = por %p59, %p60
    %p63 = scmp.ne.s32.totalorder %s48, %s62
    %p64 = scmp.eq.s32.totalorder %s17, 0
    %p65 = por %p63, %p64
    %s67 = sadd.s32 %s66, 1
    %p70 = scmp.eq.s32.totalorder %s11, 1
    %p71 = scmp.ne.s32.totalorder %s66, %s68
    %p72 = scmp.eq.s32.totalorder %s11, 0
    %p73 = por %p71, %p72
    %p74 = scmp.ne.s32.totalorder %s66, %s68
    %p75 = scmp.eq.s32.totalorder %s16, 1
    %p76 = por %p74, %p75
    %p77 = scmp.ne.s32.totalorder %s68, %s69
    %p78 = scmp.eq.s32.totalorder %s16, 0
    %p79 = por %p77, %p78
    %p80 = scmp.ne.s32.totalorder %s68, %s69
    %p81 = scmp.eq.s32.totalorder %s17, 1
    %p82 = por %p80, %p81
    %p84 = scmp.ne.s32.totalorder %s69, %s83
    %p85 = scmp.eq.s32.totalorder %s17, 0
    %p86 = por %p84, %p85
    %s87 = ssub.s32 %s11, %s18
    %p88 = scmp.eq.s32.totalorder %s87, 0
    %s90 = sadd.s32 %s89, 1
    %s91 = scalar_select %p88, %s89, %s90
    %p94 = pneg %p88
    %p95 = scmp.eq.s32.totalorder %s11, 1
    %p96 = por %p94, %p95
    %p97 = scmp.ne.s32.totalorder %s89, %s92
    %p98 = scmp.eq.s32.totalorder %s11, 0
    %p99 = por %p97, %p98
    %p100 = scmp.ne.s32.totalorder %s89, %s92
    %p101 = scmp.eq.s32.totalorder %s16, 1
    %p102 = por %p100, %p101
    %p103 = scmp.ne.s32.totalorder %s92, %s93
    %p104 = scmp.eq.s32.totalorder %s16, 0
    %p105 = por %p103, %p104
    %p106 = scmp.ne.s32.totalorder %s92, %s93
    %p107 = scmp.eq.s32.totalorder %s17, 1
    %p108 = por %p106, %p107
    %p110 = scmp.ne.s32.totalorder %s93, %s109
    %p111 = scmp.eq.s32.totalorder %s17, 0
    %p112 = por %p110, %p111
    %s113 = ssub.s32 %s11, %s18
    %p114 = scmp.eq.s32.totalorder %s113, 0
    %s116 = sadd.s32 %s115, 1
    %s117 = scalar_select %p114, %s115, %s116
    %p120 = pneg %p114
    %p121 = scmp.eq.s32.totalorder %s11, 1
    %p122 = por %p120, %p121
    %p123 = scmp.ne.s32.totalorder %s115, %s118
    %p124 = scmp.eq.s32.totalorder %s11, 0
    %p125 = por %p123, %p124
    %p126 = scmp.ne.s32.totalorder %s115, %s118
    %p127 = scmp.eq.s32.totalorder %s16, 1
    %p128 = por %p126, %p127
    %p129 = scmp.ne.s32.totalorder %s118, %s119
    %p130 = scmp.eq.s32.totalorder %s16, 0
    %p131 = por %p129, %p130
    %p132 = scmp.ne.s32.totalorder %s118, %s119
    %p133 = scmp.eq.s32.totalorder %s17, 1
    %p134 = por %p132, %p133
    %p136 = scmp.ne.s32.totalorder %s119, %s135
    %p137 = scmp.eq.s32.totalorder %s17, 0
    %p138 = por %p136, %p137
    %p139 = scmp.le.s32.totalorder 1, %s11
    %p140 = scmp.lt.s32.totalorder %s11, 3
    %p141 = pnand %p139, %p140
    %p142 = pneg %p141
    // Predicated region
    $region9: #{block_forward.2} parent=5 // pred_check
      _
    $region10: #{block_forward.2} parent=5 // pred_check_branch
      %144 = sbr.rel (%p141) target = $region12
    $region11: #{block_forward.2} parent=5 // pred_region
      %s145 = ssub.s32 %s11, 1
      // Predicated region
      $region13: #{block_forward.2} parent=11 // pred_check
        %p146 = pneg %p58
      $region14: #{block_forward.2} parent=11 // pred_check_branch
        %148 = sbr.rel (%p146) target = $region16
      $region15: #{block_forward.2} parent=11 // pred_region
        _
      $region16: #{block_forward.2} parent=11 // pred_fallthru
        _
      // Predicated region
      $region17: #{block_forward.2} parent=11 // pred_check
        %p149 = pneg %p79
      $region18: #{block_forward.2} parent=11 // pred_check_branch
        %151 = sbr.rel (%p149) target = $region20
      $region19: #{block_forward.2} parent=11 // pred_region
        _
      $region20: #{block_forward.2} parent=11 // pred_fallthru
        _
    $region12: #{block_forward.2} parent=5 // pred_fallthru
      _
    %p152 = scmp.lt.s32.totalorder %s11, 2
    // Predicated region
    $region21: #{block_forward.2} parent=5 // pred_check
      %p153 = pneg %p152
    $region22: #{block_forward.2} parent=5 // pred_check_branch
      %155 = sbr.rel (%p153) target = $region24
    $region23: #{block_forward.2} parent=5 // pred_region
      // Predicated region
      $region25: #{block_forward.2} parent=23 // pred_check
        %p156 = pneg %p31
      $region26: #{block_forward.2} parent=23 // pred_check_branch
        %158 = sbr.rel (%p156) target = $region28
      $region27: #{block_forward.2} parent=23 // pred_region
        %p159 = scmp.lt.s32.totalorder %s11, 1
        %s160 = scalar_select %p159, %s11, 1
        %s161 = smul.addr %s160, 3
        %s162 = smul.addr %s161, 4
        %s163 = scalar_lea.vmem %s0, %s162
      $region28: #{block_forward.2} parent=23 // pred_fallthru
        _
    $region24: #{block_forward.2} parent=5 // pred_fallthru
      _
    %p164 = scmp.le.s32.totalorder 1, %s11
    %p165 = scmp.lt.s32.totalorder %s11, 3
    %p166 = pnand %p164, %p165
    %p167 = pneg %p166
    // Predicated region
    $region29: #{block_forward.2} parent=5 // pred_check
      _
    $region30: #{block_forward.2} parent=5 // pred_check_branch
      %169 = sbr.rel (%p166) target = $region32
    $region31: #{block_forward.2} parent=5 // pred_region
      %s170 = ssub.s32 %s11, 1
      %p171 = scmp.lt.s32.totalorder %s16, 1
      %s172 = scalar_select %p171, %s16, 1
      %s173 = smul.addr %s172, 3
      %s174 = smul.addr %s173, 4
      %s175 = scalar_lea.vmem %s0, %s174
      %p176 = pneg %p37
      %p177 = pneg %p34
      %p178 = pneg %p58
      %p179 = pneg %p55
      %p180 = pneg %p79
      %p181 = pneg %p76
      %p182 = pneg %p105
      %p183 = pneg %p102
      %p184 = scmp.lt.s32.totalorder %s16, 1
      %s185 = scalar_select %p184, %s16, 1
      %s186 = smul.addr %s185, 2
      %s187 = smul.addr %s186, 8
      %s188 = scalar_lea.vmem %s3, %s187
      %p189 = pneg %p131
      %p190 = pneg %p128
      %p191 = scmp.lt.s32.totalorder %s16, 1
      %s192 = scalar_select %p191, %s16, 1
      %s193 = smul.addr %s192, 8
      %s194 = scalar_lea.vmem %s4, %s193
      %p195 = scmp.lt.s32.totalorder %s16, 1
      %s196 = scalar_select %p195, %s16, 1
      %s197 = smul.addr %s196, 3
      %s198 = smul.addr %s197, 4
      %s199 = scalar_lea.vmem %s0, %s198
      %p200 = scmp.lt.s32.totalorder %s16, 1
      %s201 = scalar_select %p200, %s16, 1
      %s202 = smul.addr %s201, 2
      %s203 = smul.addr %s202, 8
      %s204 = scalar_lea.vmem %s3, %s203
      %p205 = scmp.lt.s32.totalorder %s16, 1
      %s206 = scalar_select %p205, %s16, 1
      %s207 = smul.addr %s206, 8
      %s208 = scalar_lea.vmem %s4, %s207
      %v209 = vld [vmem:[%s199] sm:$0xff]
      %v210 = vld [vmem:[%s2] ss:$8 sm:$0x3]
      %v212 = vlaneseq
      %v213 = vshrl.u32 %v212, 7
      %v214 = vsub.s32 0, %v213
      %v215 = vrot.slane %v210, %v214
      %v216 = vlaneseq
      %v217 = vshrl.u32 %v216, 7
      %v218 = vsub.s32 1, %v217
      %v219 = vrot.slane %v210, %v218
      %v220 = vcombine.low %v215, %v219
      %v222 = vmul.f32 %v209, %v220
      %v223 = vld [vmem:[%s1] sm:$0xff]
      %v224 = vld [vmem:[%s199 + $0x8] sm:$0xf]
      %s225 = scalar_lea.vmem %s2, 1
      %v226 = vld [vmem:[%s225] ss:$8 sm:$0x3]
      %v228 = vlaneseq
      %v229 = vshrl.u32 %v228, 7
      %v230 = vsub.s32 0, %v229
      %v231 = vrot.slane %v226, %v230
      %v232 = vlaneseq
      %v233 = vshrl.u32 %v232, 7
      %v234 = vsub.s32 1, %v233
      %v235 = vrot.slane %v226, %v234
      %v236 = vcombine.low %v231, %v235
      %237 = vrot.lane.b32.xlu0 %v236, 1
      %v238 = vpop.permute.xlu0 %237
      %v239 = vrot.slane %v238, 4
      %vm240 = vcmask 7168
      %v241 = vsel %vm240, %v239, %v238
      %v244 = vmul.f32 %v209, %v241
      %v245 = vmul.f32 %v224, %v239
      %s246 = scalar_lea.vmem %s1, 8
      %v247 = vld [vmem:[%s246] sm:$0xff]
      %v250 = vcombine.high %v244, %v244
      %251 = vrot.lane.b32.xlu0 %v244, 127
      %v252 = vpop.permute.xlu0 %251
      %253 = vrot.lane.b32.xlu0 %v250, 127
      %v254 = vpop.permute.xlu0 %253
      %255 = vrot.lane.b32.xlu0 %v245, 127
      %v256 = vpop.permute.xlu0 %255
      %vm257 = vcmask 1039360
      %v258 = vsel %vm257, %v252, %v254
      %v259 = vsel %vm257, %v254, %v256
      %vm260 = vcmask 31744
      %v262 = vsel %vm260, %v247, 0
      %vm264 = vcmask 1043456
      %v265 = vsel %vm264, %v258, 0
      %v267 = vsel %vm264, %v259, 0
      %269 = vmatprep.subr.mxu0 0.0
      %270 = vmatpush1.msra.mxu0 0.0
      %271 = vmatprep.subr.mxu0 0.0
      %272 = vmatpush1.msra.mxu0 0.0
      %273 = vmatprep.subr.mxu0 0.0
      %274 = vmatpush1.msra.mxu0 0.0
      %275 = vmatprep.subr.mxu0 0.0
      %276 = vmatpush1.msra.mxu0 0.0
      %277 = vmatprep.subr.mxu0 0.0
      %278 = vmatpush1.msra.mxu0 0.0
      %279 = vmatprep.subr.mxu0 0.0
      %280 = vmatpush1.msra.mxu0 0.0
      %281 = vmatprep.subr.mxu0 0.0
      %282 = vmatpush1.msra.mxu0 0.0
      %283 = vmatprep.subr.mxu0 0.0
      %284 = vmatpush1.msra.mxu0 0.0
      %285 = vmatprep.subr.mxu0 0.0
      %286 = vmatpush1.msra.mxu0 0.0
      %287 = vmatprep.subr.mxu0 0.0
      %288 = vmatpush1.msra.mxu0 0.0
      %289 = vmatprep.subr.mxu0 0.0
      %290 = vmatpush1.msra.mxu0 0.0
      %291 = vmatprep.subr.mxu0 0.0
      %292 = vmatpush1.msra.mxu0 0.0
      %293 = vmatprep.subr.mxu0 0.0
      %294 = vmatpush1.msra.mxu0 0.0
      %295 = vmatprep.subr.mxu0 0.0
      %296 = vmatpush1.msra.mxu0 0.0
      %297 = vmatprep.subr.mxu0 0.0
      %298 = vmatpush1.msra.mxu0 0.0
      %299 = vmatprep.subr.mxu0 %v267
      %300 = vmatpush1.msra.mxu0 %v265
      %301 = vmatprep.subr.mxu0 0.0
      %302 = vmatpush2.msra.mxu0 0.0
      %303 = vmatprep.subr.mxu0 0.0
      %304 = vmatpush2.msra.mxu0 0.0
      %305 = vmatprep.subr.mxu0 0.0
      %306 = vmatpush2.msra.mxu0 0.0
      %307 = vmatprep.subr.mxu0 0.0
      %308 = vmatpush2.msra.mxu0 0.0
      %309 = vmatprep.subr.mxu0 0.0
      %310 = vmatpush2.msra.mxu0 0.0
      %311 = vmatprep.subr.mxu0 0.0
      %312 = vmatpush2.msra.mxu0 0.0
      %313 = vmatprep.subr.mxu0 0.0
      %314 = vmatpush2.msra.mxu0 0.0
      %315 = vmatprep.subr.mxu0 0.0
      %316 = vmatpush2.msra.mxu0 0.0
      %317 = vmatprep.subr.mxu0 0.0
      %318 = vmatpush2.msra.mxu0 0.0
      %319 = vmatprep.subr.mxu0 0.0
      %320 = vmatpush2.msra.mxu0 0.0
      %321 = vmatprep.subr.mxu0 0.0
      %322 = vmatpush2.msra.mxu0 0.0
      %323 = vmatprep.subr.mxu0 0.0
      %324 = vmatpush2.msra.mxu0 0.0
      %325 = vmatprep.subr.mxu0 0.0
      %326 = vmatpush2.msra.mxu0 0.0
      %327 = vmatprep.subr.mxu0 0.0
      %328 = vmatpush2.msra.mxu0 0.0
      %329 = vmatprep.subr.mxu0 0.0
      %330 = vmatpush2.msra.mxu0 0.0
      %331 = vmatprep.subr.mxu0 0.0
      %332 = vmatpush2.msra.mxu0 0.0
      %333 = vmatprep.mubr.f32.mxu0 0.0
      %334 = vmatmul.mubr.f32.gmra.mxu0 %v262
      %v335 = vpop.f32.mrf.mxu0
      %v336 = vadd.f32 0.0, %v335
      %v337 = vpop.f32.mrf.mxu0
      %v338 = vadd.f32 0.0, %v337
      %339 = vdwg.mxu0
      %v341 = vcombine.high %v222, %v222
      %v343 = vsel %vm260, %v223, 0
      %v345 = vsel %vm264, %v222, 0
      %v347 = vsel %vm264, %v341, 0
      %349 = vmatprep.subr.mxu0 0.0
      %350 = vmatpush1.msra.mxu0 0.0
      %351 = vmatprep.subr.mxu0 0.0
      %352 = vmatpush1.msra.mxu0 0.0
      %353 = vmatprep.subr.mxu0 0.0
      %354 = vmatpush1.msra.mxu0 0.0
      %355 = vmatprep.subr.mxu0 0.0
      %356 = vmatpush1.msra.mxu0 0.0
      %357 = vmatprep.subr.mxu0 0.0
      %358 = vmatpush1.msra.mxu0 0.0
      %359 = vmatprep.subr.mxu0 0.0
      %360 = vmatpush1.msra.mxu0 0.0
      %361 = vmatprep.subr.mxu0 0.0
      %362 = vmatpush1.msra.mxu0 0.0
      %363 = vmatprep.subr.mxu0 0.0
      %364 = vmatpush1.msra.mxu0 0.0
      %365 = vmatprep.subr.mxu0 0.0
      %366 = vmatpush1.msra.mxu0 0.0
      %367 = vmatprep.subr.mxu0 0.0
      %368 = vmatpush1.msra.mxu0 0.0
      %369 = vmatprep.subr.mxu0 0.0
      %370 = vmatpush1.msra.mxu0 0.0
      %371 = vmatprep.subr.mxu0 0.0
      %372 = vmatpush1.msra.mxu0 0.0
      %373 = vmatprep.subr.mxu0 0.0
      %374 = vmatpush1.msra.mxu0 0.0
      %375 = vmatprep.subr.mxu0 0.0
      %376 = vmatpush1.msra.mxu0 0.0
      %377 = vmatprep.subr.mxu0 0.0
      %378 = vmatpush1.msra.mxu0 0.0
      %379 = vmatprep.subr.mxu0 %v347
      %380 = vmatpush1.msra.mxu0 %v345
      %381 = vmatprep.subr.mxu0 0.0
      %382 = vmatpush2.msra.mxu0 0.0
      %383 = vmatprep.subr.mxu0 0.0
      %384 = vmatpush2.msra.mxu0 0.0
      %385 = vmatprep.subr.mxu0 0.0
      %386 = vmatpush2.msra.mxu0 0.0
      %387 = vmatprep.subr.mxu0 0.0
      %388 = vmatpush2.msra.mxu0 0.0
      %389 = vmatprep.subr.mxu0 0.0
      %390 = vmatpush2.msra.mxu0 0.0
      %391 = vmatprep.subr.mxu0 0.0
      %392 = vmatpush2.msra.mxu0 0.0
      %393 = vmatprep.subr.mxu0 0.0
      %394 = vmatpush2.msra.mxu0 0.0
      %395 = vmatprep.subr.mxu0 0.0
      %396 = vmatpush2.msra.mxu0 0.0
      %397 = vmatprep.subr.mxu0 0.0
      %398 = vmatpush2.msra.mxu0 0.0
      %399 = vmatprep.subr.mxu0 0.0
      %400 = vmatpush2.msra.mxu0 0.0
      %401 = vmatprep.subr.mxu0 0.0
      %402 = vmatpush2.msra.mxu0 0.0
      %403 = vmatprep.subr.mxu0 0.0
      %404 = vmatpush2.msra.mxu0 0.0
      %405 = vmatprep.subr.mxu0 0.0
      %406 = vmatpush2.msra.mxu0 0.0
      %407 = vmatprep.subr.mxu0 0.0
      %408 = vmatpush2.msra.mxu0 0.0
      %409 = vmatprep.subr.mxu0 0.0
      %410 = vmatpush2.msra.mxu0 0.0
      %411 = vmatprep.subr.mxu0 0.0
      %412 = vmatpush2.msra.mxu0 0.0
      %413 = vmatprep.mubr.f32.mxu0 0.0
      %414 = vmatmul.mubr.f32.gmra.mxu0 %v343
      %v415 = vpop.f32.mrf.mxu0
      %v416 = vadd.f32 %v336, %v415
      %v417 = vpop.f32.mrf.mxu0
      %v418 = vadd.f32 %v338, %v417
      %419 = vdwg.mxu0
      %v420 = vld [vmem:[%s199] sm:$0xff]
      %v421 = vld [vmem:[%s199 + $0x8] sm:$0xf]
      %s422 = scalar_lea.vmem %s2, 2
      %v423 = vld [vmem:[%s422] ss:$8 sm:$0x3]
      %v425 = vlaneseq
      %v426 = vshrl.u32 %v425, 7
      %v427 = vsub.s32 0, %v426
      %v428 = vrot.slane %v423, %v427
      %v429 = vlaneseq
      %v430 = vshrl.u32 %v429, 7
      %v431 = vsub.s32 1, %v430
      %v432 = vrot.slane %v423, %v431
      %v433 = vcombine.low %v428, %v432
      %434 = vrot.lane.b32.xlu0 %v433, 2
      %v435 = vpop.permute.xlu0 %434
      %v436 = vrot.slane %v435, 4
      %vm437 = vcmask 15360
      %v438 = vsel %vm437, %v436, %v435
      %v441 = vmul.f32 %v420, %v438
      %v442 = vmul.f32 %v421, %v436
      %s443 = scalar_lea.vmem %s1, 16
      %v444 = vld [vmem:[%s443] sm:$0xff]
      %v447 = vcombine.high %v441, %v441
      %448 = vrot.lane.b32.xlu0 %v441, 126
      %v449 = vpop.permute.xlu0 %448
      %450 = vrot.lane.b32.xlu0 %v447, 126
      %v451 = vpop.permute.xlu0 %450
      %452 = vrot.lane.b32.xlu0 %v442, 126
      %v453 = vpop.permute.xlu0 %452
      %vm454 = vcmask 1031168
      %v455 = vsel %vm454, %v449, %v451
      %v456 = vsel %vm454, %v451, %v453
      %v458 = vsel %vm260, %v444, 0
      %v460 = vsel %vm264, %v455, 0
      %v462 = vsel %vm264, %v456, 0
      %464 = vmatprep.subr.mxu0 0.0
      %465 = vmatpush1.msra.mxu0 0.0
      %466 = vmatprep.subr.mxu0 0.0
      %467 = vmatpush1.msra.mxu0 0.0
      %468 = vmatprep.subr.mxu0 0.0
      %469 = vmatpush1.msra.mxu0 0.0
      %470 = vmatprep.subr.mxu0 0.0
      %471 = vmatpush1.msra.mxu0 0.0
      %472 = vmatprep.subr.mxu0 0.0
      %473 = vmatpush1.msra.mxu0 0.0
      %474 = vmatprep.subr.mxu0 0.0
      %475 = vmatpush1.msra.mxu0 0.0
      %476 = vmatprep.subr.mxu0 0.0
      %477 = vmatpush1.msra.mxu0 0.0
      %478 = vmatprep.subr.mxu0 0.0
      %479 = vmatpush1.msra.mxu0 0.0
      %480 = vmatprep.subr.mxu0 0.0
      %481 = vmatpush1.msra.mxu0 0.0
      %482 = vmatprep.subr.mxu0 0.0
      %483 = vmatpush1.msra.mxu0 0.0
      %484 = vmatprep.subr.mxu0 0.0
      %485 = vmatpush1.msra.mxu0 0.0
      %486 = vmatprep.subr.mxu0 0.0
      %487 = vmatpush1.msra.mxu0 0.0
      %488 = vmatprep.subr.mxu0 0.0
      %489 = vmatpush1.msra.mxu0 0.0
      %490 = vmatprep.subr.mxu0 0.0
      %491 = vmatpush1.msra.mxu0 0.0
      %492 = vmatprep.subr.mxu0 0.0
      %493 = vmatpush1.msra.mxu0 0.0
      %494 = vmatprep.subr.mxu0 %v462
      %495 = vmatpush1.msra.mxu0 %v460
      %496 = vmatprep.subr.mxu0 0.0
      %497 = vmatpush2.msra.mxu0 0.0
      %498 = vmatprep.subr.mxu0 0.0
      %499 = vmatpush2.msra.mxu0 0.0
      %500 = vmatprep.subr.mxu0 0.0
      %501 = vmatpush2.msra.mxu0 0.0
      %502 = vmatprep.subr.mxu0 0.0
      %503 = vmatpush2.msra.mxu0 0.0
      %504 = vmatprep.subr.mxu0 0.0
      %505 = vmatpush2.msra.mxu0 0.0
      %506 = vmatprep.subr.mxu0 0.0
      %507 = vmatpush2.msra.mxu0 0.0
      %508 = vmatprep.subr.mxu0 0.0
      %509 = vmatpush2.msra.mxu0 0.0
      %510 = vmatprep.subr.mxu0 0.0
      %511 = vmatpush2.msra.mxu0 0.0
      %512 = vmatprep.subr.mxu0 0.0
      %513 = vmatpush2.msra.mxu0 0.0
      %514 = vmatprep.subr.mxu0 0.0
      %515 = vmatpush2.msra.mxu0 0.0
      %516 = vmatprep.subr.mxu0 0.0
      %517 = vmatpush2.msra.mxu0 0.0
      %518 = vmatprep.subr.mxu0 0.0
      %519 = vmatpush2.msra.mxu0 0.0
      %520 = vmatprep.subr.mxu0 0.0
      %521 = vmatpush2.msra.mxu0 0.0
      %522 = vmatprep.subr.mxu0 0.0
      %523 = vmatpush2.msra.mxu0 0.0
      %524 = vmatprep.subr.mxu0 0.0
      %525 = vmatpush2.msra.mxu0 0.0
      %526 = vmatprep.subr.mxu0 0.0
      %527 = vmatpush2.msra.mxu0 0.0
      %528 = vmatprep.mubr.f32.mxu0 0.0
      %529 = vmatmul.mubr.f32.gmra.mxu0 %v458
      %v530 = vpop.f32.mrf.mxu0
      %v531 = vadd.f32 0.0, %v530
      %v532 = vpop.f32.mrf.mxu0
      %v533 = vadd.f32 0.0, %v532
      %534 = vdwg.mxu0
      %v535 = vadd.f32 %v416, %v531
      %v536 = vadd.f32 %v418, %v533
      %v537 = vld [vmem:[%s199] sm:$0xff]
      %v538 = vld [vmem:[%s199 + $0x8] sm:$0xf]
      %s539 = scalar_lea.vmem %s2, 3
      %v540 = vld [vmem:[%s539] ss:$8 sm:$0x3]
      %v542 = vlaneseq
      %v543 = vshrl.u32 %v542, 7
      %v544 = vsub.s32 0, %v543
      %v545 = vrot.slane %v540, %v544
      %v546 = vlaneseq
      %v547 = vshrl.u32 %v546, 7
      %v548 = vsub.s32 1, %v547
      %v549 = vrot.slane %v540, %v548
      %v550 = vcombine.low %v545, %v549
      %551 = vrot.lane.b32.xlu0 %v550, 16
      %v552 = vpop.permute.xlu0 %551
      %v553 = vrot.slane %v552, 4
      %vm554 = vcmask 130048
      %v555 = vsel %vm554, %v553, %v552
      %v558 = vmul.f32 %v537, %v555
      %v559 = vmul.f32 %v538, %v553
      %s560 = scalar_lea.vmem %s1, 24
      %v561 = vld [vmem:[%s560] sm:$0xff]
      %v564 = vcombine.high %v558, %v558
      %565 = vrot.lane.b32.xlu0 %v558, 112
      %v566 = vpop.permute.xlu0 %565
      %567 = vrot.lane.b32.xlu0 %v564, 112
      %v568 = vpop.permute.xlu0 %567
      %569 = vrot.lane.b32.xlu0 %v559, 112
      %v570 = vpop.permute.xlu0 %569
      %vm571 = vcmask 916480
      %v572 = vsel %vm571, %v566, %v568
      %v573 = vsel %vm571, %v568, %v570
      %v575 = vsel %vm260, %v561, 0
      %v577 = vsel %vm264, %v572, 0
      %v579 = vsel %vm264, %v573, 0
      %581 = vmatprep.subr.mxu0 0.0
      %582 = vmatpush1.msra.mxu0 0.0
      %583 = vmatprep.subr.mxu0 0.0
      %584 = vmatpush1.msra.mxu0 0.0
      %585 = vmatprep.subr.mxu0 0.0
      %586 = vmatpush1.msra.mxu0 0.0
      %587 = vmatprep.subr.mxu0 0.0
      %588 = vmatpush1.msra.mxu0 0.0
      %589 = vmatprep.subr.mxu0 0.0
      %590 = vmatpush1.msra.mxu0 0.0
      %591 = vmatprep.subr.mxu0 0.0
      %592 = vmatpush1.msra.mxu0 0.0
      %593 = vmatprep.subr.mxu0 0.0
      %594 = vmatpush1.msra.mxu0 0.0
      %595 = vmatprep.subr.mxu0 0.0
      %596 = vmatpush1.msra.mxu0 0.0
      %597 = vmatprep.subr.mxu0 0.0
      %598 = vmatpush1.msra.mxu0 0.0
      %599 = vmatprep.subr.mxu0 0.0
      %600 = vmatpush1.msra.mxu0 0.0
      %601 = vmatprep.subr.mxu0 0.0
      %602 = vmatpush1.msra.mxu0 0.0
      %603 = vmatprep.subr.mxu0 0.0
      %604 = vmatpush1.msra.mxu0 0.0
      %605 = vmatprep.subr.mxu0 0.0
      %606 = vmatpush1.msra.mxu0 0.0
      %607 = vmatprep.subr.mxu0 0.0
      %608 = vmatpush1.msra.mxu0 0.0
      %609 = vmatprep.subr.mxu0 0.0
      %610 = vmatpush1.msra.mxu0 0.0
      %611 = vmatprep.subr.mxu0 %v579
      %612 = vmatpush1.msra.mxu0 %v577
      %613 = vmatprep.subr.mxu0 0.0
      %614 = vmatpush2.msra.mxu0 0.0
      %615 = vmatprep.subr.mxu0 0.0
      %616 = vmatpush2.msra.mxu0 0.0
      %617 = vmatprep.subr.mxu0 0.0
      %618 = vmatpush2.msra.mxu0 0.0
      %619 = vmatprep.subr.mxu0 0.0
      %620 = vmatpush2.msra.mxu0 0.0
      %621 = vmatprep.subr.mxu0 0.0
      %622 = vmatpush2.msra.mxu0 0.0
      %623 = vmatprep.subr.mxu0 0.0
      %624 = vmatpush2.msra.mxu0 0.0
      %625 = vmatprep.subr.mxu0 0.0
      %626 = vmatpush2.msra.mxu0 0.0
      %627 = vmatprep.subr.mxu0 0.0
      %628 = vmatpush2.msra.mxu0 0.0
      %629 = vmatprep.subr.mxu0 0.0
      %630 = vmatpush2.msra.mxu0 0.0
      %631 = vmatprep.subr.mxu0 0.0
      %632 = vmatpush2.msra.mxu0 0.0
      %633 = vmatprep.subr.mxu0 0.0
      %634 = vmatpush2.msra.mxu0 0.0
      %635 = vmatprep.subr.mxu0 0.0
      %636 = vmatpush2.msra.mxu0 0.0
      %637 = vmatprep.subr.mxu0 0.0
      %638 = vmatpush2.msra.mxu0 0.0
      %639 = vmatprep.subr.mxu0 0.0
      %640 = vmatpush2.msra.mxu0 0.0
      %641 = vmatprep.subr.mxu0 0.0
      %642 = vmatpush2.msra.mxu0 0.0
      %643 = vmatprep.subr.mxu0 0.0
      %644 = vmatpush2.msra.mxu0 0.0
      %645 = vmatprep.mubr.f32.mxu0 0.0
      %646 = vmatmul.mubr.f32.gmra.mxu0 %v575
      %v647 = vpop.f32.mrf.mxu0
      %v648 = vadd.f32 0.0, %v647
      %v649 = vpop.f32.mrf.mxu0
      %v650 = vadd.f32 0.0, %v649
      %651 = vdwg.mxu0
      %v652 = vadd.f32 %v535, %v648
      %v653 = vadd.f32 %v536, %v650
      %v654 = vld [vmem:[%s199] sm:$0xff]
      %v655 = vld [vmem:[%s199 + $0x8] sm:$0xf]
      %s656 = scalar_lea.vmem %s2, 4
      %v657 = vld [vmem:[%s656] ss:$8 sm:$0x3]
      %v659 = vlaneseq
      %v660 = vshrl.u32 %v659, 7
      %v661 = vsub.s32 0, %v660
      %v662 = vrot.slane %v657, %v661
      %v663 = vlaneseq
      %v664 = vshrl.u32 %v663, 7
      %v665 = vsub.s32 1, %v664
      %v666 = vrot.slane %v657, %v665
      %v667 = vcombine.low %v662, %v666
      %668 = vrot.lane.b32.xlu0 %v667, 17
      %v669 = vpop.permute.xlu0 %668
      %v670 = vrot.slane %v669, 4
      %vm671 = vcmask 138240
      %v672 = vsel %vm671, %v670, %v669
      %v675 = vmul.f32 %v654, %v672
      %v676 = vmul.f32 %v655, %v670
      %s677 = scalar_lea.vmem %s1, 32
      %v678 = vld [vmem:[%s677] sm:$0xff]
      %v681 = vcombine.high %v675, %v675
      %682 = vrot.lane.b32.xlu0 %v675, 111
      %v683 = vpop.permute.xlu0 %682
      %684 = vrot.lane.b32.xlu0 %v681, 111
      %v685 = vpop.permute.xlu0 %684
      %686 = vrot.lane.b32.xlu0 %v676, 111
      %v687 = vpop.permute.xlu0 %686
      %vm688 = vcmask 908288
      %v689 = vsel %vm688, %v683, %v685
      %v690 = vsel %vm688, %v685, %v687
      %v692 = vsel %vm260, %v678, 0
      %v694 = vsel %vm264, %v689, 0
      %v696 = vsel %vm264, %v690, 0
      %698 = vmatprep.subr.mxu0 0.0
      %699 = vmatpush1.msra.mxu0 0.0
      %700 = vmatprep.subr.mxu0 0.0
      %701 = vmatpush1.msra.mxu0 0.0
      %702 = vmatprep.subr.mxu0 0.0
      %703 = vmatpush1.msra.mxu0 0.0
      %704 = vmatprep.subr.mxu0 0.0
      %705 = vmatpush1.msra.mxu0 0.0
      %706 = vmatprep.subr.mxu0 0.0
      %707 = vmatpush1.msra.mxu0 0.0
      %708 = vmatprep.subr.mxu0 0.0
      %709 = vmatpush1.msra.mxu0 0.0
      %710 = vmatprep.subr.mxu0 0.0
      %711 = vmatpush1.msra.mxu0 0.0
      %712 = vmatprep.subr.mxu0 0.0
      %713 = vmatpush1.msra.mxu0 0.0
      %714 = vmatprep.subr.mxu0 0.0
      %715 = vmatpush1.msra.mxu0 0.0
      %716 = vmatprep.subr.mxu0 0.0
      %717 = vmatpush1.msra.mxu0 0.0
      %718 = vmatprep.subr.mxu0 0.0
      %719 = vmatpush1.msra.mxu0 0.0
      %720 = vmatprep.subr.mxu0 0.0
      %721 = vmatpush1.msra.mxu0 0.0
      %722 = vmatprep.subr.mxu0 0.0
      %723 = vmatpush1.msra.mxu0 0.0
      %724 = vmatprep.subr.mxu0 0.0
      %725 = vmatpush1.msra.mxu0 0.0
      %726 = vmatprep.subr.mxu0 0.0
      %727 = vmatpush1.msra.mxu0 0.0
      %728 = vmatprep.subr.mxu0 %v696
      %729 = vmatpush1.msra.mxu0 %v694
      %730 = vmatprep.subr.mxu0 0.0
      %731 = vmatpush2.msra.mxu0 0.0
      %732 = vmatprep.subr.mxu0 0.0
      %733 = vmatpush2.msra.mxu0 0.0
      %734 = vmatprep.subr.mxu0 0.0
      %735 = vmatpush2.msra.mxu0 0.0
      %736 = vmatprep.subr.mxu0 0.0
      %737 = vmatpush2.msra.mxu0 0.0
      %738 = vmatprep.subr.mxu0 0.0
      %739 = vmatpush2.msra.mxu0 0.0
      %740 = vmatprep.subr.mxu0 0.0
      %741 = vmatpush2.msra.mxu0 0.0
      %742 = vmatprep.subr.mxu0 0.0
      %743 = vmatpush2.msra.mxu0 0.0
      %744 = vmatprep.subr.mxu0 0.0
      %745 = vmatpush2.msra.mxu0 0.0
      %746 = vmatprep.subr.mxu0 0.0
      %747 = vmatpush2.msra.mxu0 0.0
      %748 = vmatprep.subr.mxu0 0.0
      %749 = vmatpush2.msra.mxu0 0.0
      %750 = vmatprep.subr.mxu0 0.0
      %751 = vmatpush2.msra.mxu0 0.0
      %752 = vmatprep.subr.mxu0 0.0
      %753 = vmatpush2.msra.mxu0 0.0
      %754 = vmatprep.subr.mxu0 0.0
      %755 = vmatpush2.msra.mxu0 0.0
      %756 = vmatprep.subr.mxu0 0.0
      %757 = vmatpush2.msra.mxu0 0.0
      %758 = vmatprep.subr.mxu0 0.0
      %759 = vmatpush2.msra.mxu0 0.0
      %760 = vmatprep.subr.mxu0 0.0
      %761 = vmatpush2.msra.mxu0 0.0
      %762 = vmatprep.mubr.f32.mxu0 0.0
      %763 = vmatmul.mubr.f32.gmra.mxu0 %v692
      %v764 = vpop.f32.mrf.mxu0
      %v765 = vadd.f32 0.0, %v764
      %v766 = vpop.f32.mrf.mxu0
      %v767 = vadd.f32 0.0, %v766
      %768 = vdwg.mxu0
      %v769 = vadd.f32 %v652, %v765
      %v770 = vadd.f32 %v653, %v767
      %v771 = vld [vmem:[%s199] sm:$0xff]
      %v772 = vld [vmem:[%s199 + $0x8] sm:$0xf]
      %s773 = scalar_lea.vmem %s2, 5
      %v774 = vld [vmem:[%s773] ss:$8 sm:$0x3]
      %v776 = vlaneseq
      %v777 = vshrl.u32 %v776, 7
      %v778 = vsub.s32 0, %v777
      %v779 = vrot.slane %v774, %v778
      %v780 = vlaneseq
      %v781 = vshrl.u32 %v780, 7
      %v782 = vsub.s32 1, %v781
      %v783 = vrot.slane %v774, %v782
      %v784 = vcombine.low %v779, %v783
      %785 = vrot.lane.b32.xlu0 %v784, 18
      %v786 = vpop.permute.xlu0 %785
      %v787 = vrot.slane %v786, 4
      %vm788 = vcmask 146432
      %v789 = vsel %vm788, %v787, %v786
      %v792 = vmul.f32 %v771, %v789
      %v793 = vmul.f32 %v772, %v787
      %s794 = scalar_lea.vmem %s1, 40
      %v795 = vld [vmem:[%s794] sm:$0xff]
      %v798 = vcombine.high %v792, %v792
      %799 = vrot.lane.b32.xlu0 %v792, 110
      %v800 = vpop.permute.xlu0 %799
      %801 = vrot.lane.b32.xlu0 %v798, 110
      %v802 = vpop.permute.xlu0 %801
      %803 = vrot.lane.b32.xlu0 %v793, 110
      %v804 = vpop.permute.xlu0 %803
      %vm805 = vcmask 900096
      %v806 = vsel %vm805, %v800, %v802
      %v807 = vsel %vm805, %v802, %v804
      %v809 = vsel %vm260, %v795, 0
      %v811 = vsel %vm264, %v806, 0
      %v813 = vsel %vm264, %v807, 0
      %815 = vmatprep.subr.mxu0 0.0
      %816 = vmatpush1.msra.mxu0 0.0
      %817 = vmatprep.subr.mxu0 0.0
      %818 = vmatpush1.msra.mxu0 0.0
      %819 = vmatprep.subr.mxu0 0.0
      %820 = vmatpush1.msra.mxu0 0.0
      %821 = vmatprep.subr.mxu0 0.0
      %822 = vmatpush1.msra.mxu0 0.0
      %823 = vmatprep.subr.mxu0 0.0
      %824 = vmatpush1.msra.mxu0 0.0
      %825 = vmatprep.subr.mxu0 0.0
      %826 = vmatpush1.msra.mxu0 0.0
      %827 = vmatprep.subr.mxu0 0.0
      %828 = vmatpush1.msra.mxu0 0.0
      %829 = vmatprep.subr.mxu0 0.0
      %830 = vmatpush1.msra.mxu0 0.0
      %831 = vmatprep.subr.mxu0 0.0
      %832 = vmatpush1.msra.mxu0 0.0
      %833 = vmatprep.subr.mxu0 0.0
      %834 = vmatpush1.msra.mxu0 0.0
      %835 = vmatprep.subr.mxu0 0.0
      %836 = vmatpush1.msra.mxu0 0.0
      %837 = vmatprep.subr.mxu0 0.0
      %838 = vmatpush1.msra.mxu0 0.0
      %839 = vmatprep.subr.mxu0 0.0
      %840 = vmatpush1.msra.mxu0 0.0
      %841 = vmatprep.subr.mxu0 0.0
      %842 = vmatpush1.msra.mxu0 0.0
      %843 = vmatprep.subr.mxu0 0.0
      %844 = vmatpush1.msra.mxu0 0.0
      %845 = vmatprep.subr.mxu0 %v813
      %846 = vmatpush1.msra.mxu0 %v811
      %847 = vmatprep.subr.mxu0 0.0
      %848 = vmatpush2.msra.mxu0 0.0
      %849 = vmatprep.subr.mxu0 0.0
      %850 = vmatpush2.msra.mxu0 0.0
      %851 = vmatprep.subr.mxu0 0.0
      %852 = vmatpush2.msra.mxu0 0.0
      %853 = vmatprep.subr.mxu0 0.0
      %854 = vmatpush2.msra.mxu0 0.0
      %855 = vmatprep.subr.mxu0 0.0
      %856 = vmatpush2.msra.mxu0 0.0
      %857 = vmatprep.subr.mxu0 0.0
      %858 = vmatpush2.msra.mxu0 0.0
      %859 = vmatprep.subr.mxu0 0.0
      %860 = vmatpush2.msra.mxu0 0.0
      %861 = vmatprep.subr.mxu0 0.0
      %862 = vmatpush2.msra.mxu0 0.0
      %863 = vmatprep.subr.mxu0 0.0
      %864 = vmatpush2.msra.mxu0 0.0
      %865 = vmatprep.subr.mxu0 0.0
      %866 = vmatpush2.msra.mxu0 0.0
      %867 = vmatprep.subr.mxu0 0.0
      %868 = vmatpush2.msra.mxu0 0.0
      %869 = vmatprep.subr.mxu0 0.0
      %870 = vmatpush2.msra.mxu0 0.0
      %871 = vmatprep.subr.mxu0 0.0
      %872 = vmatpush2.msra.mxu0 0.0
      %873 = vmatprep.subr.mxu0 0.0
      %874 = vmatpush2.msra.mxu0 0.0
      %875 = vmatprep.subr.mxu0 0.0
      %876 = vmatpush2.msra.mxu0 0.0
      %877 = vmatprep.subr.mxu0 0.0
      %878 = vmatpush2.msra.mxu0 0.0
      %879 = vmatprep.mubr.f32.mxu0 0.0
      %880 = vmatmul.mubr.f32.gmra.mxu0 %v809
      %v881 = vpop.f32.mrf.mxu0
      %v882 = vadd.f32 0.0, %v881
      %v883 = vpop.f32.mrf.mxu0
      %v884 = vadd.f32 0.0, %v883
      %885 = vdwg.mxu0
      %v886 = vadd.f32 %v769, %v882
      %v887 = vadd.f32 %v770, %v884
      %v888 = vld [vmem:[%s199] sm:$0xff]
      %v889 = vld [vmem:[%s199 + $0x8] sm:$0xf]
      %s890 = scalar_lea.vmem %s2, 6
      %v891 = vld [vmem:[%s890] ss:$8 sm:$0x3]
      %v893 = vlaneseq
      %v894 = vshrl.u32 %v893, 7
      %v895 = vsub.s32 0, %v894
      %v896 = vrot.slane %v891, %v895
      %v897 = vlaneseq
      %v898 = vshrl.u32 %v897, 7
      %v899 = vsub.s32 1, %v898
      %v900 = vrot.slane %v891, %v899
      %v901 = vcombine.low %v896, %v900
      %902 = vrot.lane.b32.xlu0 %v901, 32
      %v903 = vpop.permute.xlu0 %902
      %v904 = vrot.slane %v903, 4
      %vm905 = vcmask 261120
      %v906 = vsel %vm905, %v904, %v903
      %v909 = vmul.f32 %v888, %v906
      %v910 = vmul.f32 %v889, %v904
      %s911 = scalar_lea.vmem %s1, 48
      %v912 = vld [vmem:[%s911] sm:$0xff]
      %v915 = vcombine.high %v909, %v909
      %916 = vrot.lane.b32.xlu0 %v909, 96
      %v917 = vpop.permute.xlu0 %916
      %918 = vrot.lane.b32.xlu0 %v915, 96
      %v919 = vpop.permute.xlu0 %918
      %920 = vrot.lane.b32.xlu0 %v910, 96
      %v921 = vpop.permute.xlu0 %920
      %vm922 = vcmask 785408
      %v923 = vsel %vm922, %v917, %v919
      %v924 = vsel %vm922, %v919, %v921
      %v926 = vsel %vm260, %v912, 0
      %v928 = vsel %vm264, %v923, 0
      %v930 = vsel %vm264, %v924, 0
      %932 = vmatprep.subr.mxu0 0.0
      %933 = vmatpush1.msra.mxu0 0.0
      %934 = vmatprep.subr.mxu0 0.0
      %935 = vmatpush1.msra.mxu0 0.0
      %936 = vmatprep.subr.mxu0 0.0
      %937 = vmatpush1.msra.mxu0 0.0
      %938 = vmatprep.subr.mxu0 0.0
      %939 = vmatpush1.msra.mxu0 0.0
      %940 = vmatprep.subr.mxu0 0.0
      %941 = vmatpush1.msra.mxu0 0.0
      %942 = vmatprep.subr.mxu0 0.0
      %943 = vmatpush1.msra.mxu0 0.0
      %944 = vmatprep.subr.mxu0 0.0
      %945 = vmatpush1.msra.mxu0 0.0
      %946 = vmatprep.subr.mxu0 0.0
      %947 = vmatpush1.msra.mxu0 0.0
      %948 = vmatprep.subr.mxu0 0.0
      %949 = vmatpush1.msra.mxu0 0.0
      %950 = vmatprep.subr.mxu0 0.0
      %951 = vmatpush1.msra.mxu0 0.0
      %952 = vmatprep.subr.mxu0 0.0
      %953 = vmatpush1.msra.mxu0 0.0
      %954 = vmatprep.subr.mxu0 0.0
      %955 = vmatpush1.msra.mxu0 0.0
      %956 = vmatprep.subr.mxu0 0.0
      %957 = vmatpush1.msra.mxu0 0.0
      %958 = vmatprep.subr.mxu0 0.0
      %959 = vmatpush1.msra.mxu0 0.0
      %960 = vmatprep.subr.mxu0 0.0
      %961 = vmatpush1.msra.mxu0 0.0
      %962 = vmatprep.subr.mxu0 %v930
      %963 = vmatpush1.msra.mxu0 %v928
      %964 = vmatprep.subr.mxu0 0.0
      %965 = vmatpush2.msra.mxu0 0.0
      %966 = vmatprep.subr.mxu0 0.0
      %967 = vmatpush2.msra.mxu0 0.0
      %968 = vmatprep.subr.mxu0 0.0
      %969 = vmatpush2.msra.mxu0 0.0
      %970 = vmatprep.subr.mxu0 0.0
      %971 = vmatpush2.msra.mxu0 0.0
      %972 = vmatprep.subr.mxu0 0.0
      %973 = vmatpush2.msra.mxu0 0.0
      %974 = vmatprep.subr.mxu0 0.0
      %975 = vmatpush2.msra.mxu0 0.0
      %976 = vmatprep.subr.mxu0 0.0
      %977 = vmatpush2.msra.mxu0 0.0
      %978 = vmatprep.subr.mxu0 0.0
      %979 = vmatpush2.msra.mxu0 0.0
      %980 = vmatprep.subr.mxu0 0.0
      %981 = vmatpush2.msra.mxu0 0.0
      %982 = vmatprep.subr.mxu0 0.0
      %983 = vmatpush2.msra.mxu0 0.0
      %984 = vmatprep.subr.mxu0 0.0
      %985 = vmatpush2.msra.mxu0 0.0
      %986 = vmatprep.subr.mxu0 0.0
      %987 = vmatpush2.msra.mxu0 0.0
      %988 = vmatprep.subr.mxu0 0.0
      %989 = vmatpush2.msra.mxu0 0.0
      %990 = vmatprep.subr.mxu0 0.0
      %991 = vmatpush2.msra.mxu0 0.0
      %992 = vmatprep.subr.mxu0 0.0
      %993 = vmatpush2.msra.mxu0 0.0
      %994 = vmatprep.subr.mxu0 0.0
      %995 = vmatpush2.msra.mxu0 0.0
      %996 = vmatprep.mubr.f32.mxu0 0.0
      %997 = vmatmul.mubr.f32.gmra.mxu0 %v926
      %v998 = vpop.f32.mrf.mxu0
      %v999 = vadd.f32 0.0, %v998
      %v1000 = vpop.f32.mrf.mxu0
      %v1001 = vadd.f32 0.0, %v1000
      %1002 = vdwg.mxu0
      %v1003 = vadd.f32 %v886, %v999
      %v1004 = vadd.f32 %v887, %v1001
      %v1005 = vld [vmem:[%s199] sm:$0xff]
      %v1006 = vld [vmem:[%s199 + $0x8] sm:$0xf]
      %s1007 = scalar_lea.vmem %s2, 7
      %v1008 = vld [vmem:[%s1007] ss:$8 sm:$0x3]
      %v1010 = vlaneseq
      %v1011 = vshrl.u32 %v1010, 7
      %v1012 = vsub.s32 0, %v1011
      %v1013 = vrot.slane %v1008, %v1012
      %v1014 = vlaneseq
      %v1015 = vshrl.u32 %v1014, 7
      %v1016 = vsub.s32 1, %v1015
      %v1017 = vrot.slane %v1008, %v1016
      %v1018 = vcombine.low %v1013, %v1017
      %1019 = vrot.lane.b32.xlu0 %v1018, 33
      %v1020 = vpop.permute.xlu0 %1019
      %v1021 = vrot.slane %v1020, 4
      %vm1022 = vcmask 269312
      %v1023 = vsel %vm1022, %v1021, %v1020
      %v1026 = vmul.f32 %v1005, %v1023
      %v1027 = vmul.f32 %v1006, %v1021
      %s1028 = scalar_lea.vmem %s1, 56
      %v1029 = vld [vmem:[%s1028] sm:$0xff]
      %v1032 = vcombine.high %v1026, %v1026
      %1033 = vrot.lane.b32.xlu0 %v1026, 95
      %v1034 = vpop.permute.xlu0 %1033
      %1035 = vrot.lane.b32.xlu0 %v1032, 95
      %v1036 = vpop.permute.xlu0 %1035
      %1037 = vrot.lane.b32.xlu0 %v1027, 95
      %v1038 = vpop.permute.xlu0 %1037
      %vm1039 = vcmask 777216
      %v1040 = vsel %vm1039, %v1034, %v1036
      %v1041 = vsel %vm1039, %v1036, %v1038
      %v1043 = vsel %vm260, %v1029, 0
      %v1045 = vsel %vm264, %v1040, 0
      %v1047 = vsel %vm264, %v1041, 0
      %1049 = vmatprep.subr.mxu0 0.0
      %1050 = vmatpush1.msra.mxu0 0.0
      %1051 = vmatprep.subr.mxu0 0.0
      %1052 = vmatpush1.msra.mxu0 0.0
      %1053 = vmatprep.subr.mxu0 0.0
      %1054 = vmatpush1.msra.mxu0 0.0
      %1055 = vmatprep.subr.mxu0 0.0
      %1056 = vmatpush1.msra.mxu0 0.0
      %1057 = vmatprep.subr.mxu0 0.0
      %1058 = vmatpush1.msra.mxu0 0.0
      %1059 = vmatprep.subr.mxu0 0.0
      %1060 = vmatpush1.msra.mxu0 0.0
      %1061 = vmatprep.subr.mxu0 0.0
      %1062 = vmatpush1.msra.mxu0 0.0
      %1063 = vmatprep.subr.mxu0 0.0
      %1064 = vmatpush1.msra.mxu0 0.0
      %1065 = vmatprep.subr.mxu0 0.0
      %1066 = vmatpush1.msra.mxu0 0.0
      %1067 = vmatprep.subr.mxu0 0.0
      %1068 = vmatpush1.msra.mxu0 0.0
      %1069 = vmatprep.subr.mxu0 0.0
      %1070 = vmatpush1.msra.mxu0 0.0
      %1071 = vmatprep.subr.mxu0 0.0
      %1072 = vmatpush1.msra.mxu0 0.0
      %1073 = vmatprep.subr.mxu0 0.0
      %1074 = vmatpush1.msra.mxu0 0.0
      %1075 = vmatprep.subr.mxu0 0.0
      %1076 = vmatpush1.msra.mxu0 0.0
      %1077 = vmatprep.subr.mxu0 0.0
      %1078 = vmatpush1.msra.mxu0 0.0
      %1079 = vmatprep.subr.mxu0 %v1047
      %1080 = vmatpush1.msra.mxu0 %v1045
      %1081 = vmatprep.subr.mxu0 0.0
      %1082 = vmatpush2.msra.mxu0 0.0
      %1083 = vmatprep.subr.mxu0 0.0
      %1084 = vmatpush2.msra.mxu0 0.0
      %1085 = vmatprep.subr.mxu0 0.0
      %1086 = vmatpush2.msra.mxu0 0.0
      %1087 = vmatprep.subr.mxu0 0.0
      %1088 = vmatpush2.msra.mxu0 0.0
      %1089 = vmatprep.subr.mxu0 0.0
      %1090 = vmatpush2.msra.mxu0 0.0
      %1091 = vmatprep.subr.mxu0 0.0
      %1092 = vmatpush2.msra.mxu0 0.0
      %1093 = vmatprep.subr.mxu0 0.0
      %1094 = vmatpush2.msra.mxu0 0.0
      %1095 = vmatprep.subr.mxu0 0.0
      %1096 = vmatpush2.msra.mxu0 0.0
      %1097 = vmatprep.subr.mxu0 0.0
      %1098 = vmatpush2.msra.mxu0 0.0
      %1099 = vmatprep.subr.mxu0 0.0
      %1100 = vmatpush2.msra.mxu0 0.0
      %1101 = vmatprep.subr.mxu0 0.0
      %1102 = vmatpush2.msra.mxu0 0.0
      %1103 = vmatprep.subr.mxu0 0.0
      %1104 = vmatpush2.msra.mxu0 0.0
      %1105 = vmatprep.subr.mxu0 0.0
      %1106 = vmatpush2.msra.mxu0 0.0
      %1107 = vmatprep.subr.mxu0 0.0
      %1108 = vmatpush2.msra.mxu0 0.0
      %1109 = vmatprep.subr.mxu0 0.0
      %1110 = vmatpush2.msra.mxu0 0.0
      %1111 = vmatprep.subr.mxu0 0.0
      %1112 = vmatpush2.msra.mxu0 0.0
      %1113 = vmatprep.mubr.f32.mxu0 0.0
      %1114 = vmatmul.mubr.f32.gmra.mxu0 %v1043
      %v1115 = vpop.f32.mrf.mxu0
      %v1116 = vadd.f32 0.0, %v1115
      %v1117 = vpop.f32.mrf.mxu0
      %v1118 = vadd.f32 0.0, %v1117
      %1119 = vdwg.mxu0
      %v1120 = vadd.f32 %v1003, %v1116
      %v1121 = vadd.f32 %v1004, %v1118
      %v1122 = vld [vmem:[%s199] sm:$0xff]
      %v1123 = vld [vmem:[%s199 + $0x8] sm:$0xf]
      %s1124 = scalar_lea.vmem %s2, 16
      %v1125 = vld [vmem:[%s1124] ss:$8 sm:$0x3]
      %v1127 = vlaneseq
      %v1128 = vshrl.u32 %v1127, 7
      %v1129 = vsub.s32 0, %v1128
      %v1130 = vrot.slane %v1125, %v1129
      %v1131 = vlaneseq
      %v1132 = vshrl.u32 %v1131, 7
      %v1133 = vsub.s32 1, %v1132
      %v1134 = vrot.slane %v1125, %v1133
      %v1135 = vcombine.low %v1130, %v1134
      %1136 = vrot.lane.b32.xlu0 %v1135, 34
      %v1137 = vpop.permute.xlu0 %1136
      %v1138 = vrot.slane %v1137, 4
      %vm1139 = vcmask 277504
      %v1140 = vsel %vm1139, %v1138, %v1137
      %v1143 = vmul.f32 %v1122, %v1140
      %v1144 = vmul.f32 %v1123, %v1138
      %s1145 = scalar_lea.vmem %s1, 64
      %v1146 = vld [vmem:[%s1145] sm:$0xff]
      %v1149 = vcombine.high %v1143, %v1143
      %1150 = vrot.lane.b32.xlu0 %v1143, 94
      %v1151 = vpop.permute.xlu0 %1150
      %1152 = vrot.lane.b32.xlu0 %v1149, 94
      %v1153 = vpop.permute.xlu0 %1152
      %1154 = vrot.lane.b32.xlu0 %v1144, 94
      %v1155 = vpop.permute.xlu0 %1154
      %vm1156 = vcmask 769024
      %v1157 = vsel %vm1156, %v1151, %v1153
      %v1158 = vsel %vm1156, %v1153, %v1155
      %v1160 = vsel %vm260, %v1146, 0
      %v1162 = vsel %vm264, %v1157, 0
      %v1164 = vsel %vm264, %v1158, 0
      %1166 = vmatprep.subr.mxu0 0.0
      %1167 = vmatpush1.msra.mxu0 0.0
      %1168 = vmatprep.subr.mxu0 0.0
      %1169 = vmatpush1.msra.mxu0 0.0
      %1170 = vmatprep.subr.mxu0 0.0
      %1171 = vmatpush1.msra.mxu0 0.0
      %1172 = vmatprep.subr.mxu0 0.0
      %1173 = vmatpush1.msra.mxu0 0.0
      %1174 = vmatprep.subr.mxu0 0.0
      %1175 = vmatpush1.msra.mxu0 0.0
      %1176 = vmatprep.subr.mxu0 0.0
      %1177 = vmatpush1.msra.mxu0 0.0
      %1178 = vmatprep.subr.mxu0 0.0
      %1179 = vmatpush1.msra.mxu0 0.0
      %1180 = vmatprep.subr.mxu0 0.0
      %1181 = vmatpush1.msra.mxu0 0.0
      %1182 = vmatprep.subr.mxu0 0.0
      %1183 = vmatpush1.msra.mxu0 0.0
      %1184 = vmatprep.subr.mxu0 0.0
      %1185 = vmatpush1.msra.mxu0 0.0
      %1186 = vmatprep.subr.mxu0 0.0
      %1187 = vmatpush1.msra.mxu0 0.0
      %1188 = vmatprep.subr.mxu0 0.0
      %1189 = vmatpush1.msra.mxu0 0.0
      %1190 = vmatprep.subr.mxu0 0.0
      %1191 = vmatpush1.msra.mxu0 0.0
      %1192 = vmatprep.subr.mxu0 0.0
      %1193 = vmatpush1.msra.mxu0 0.0
      %1194 = vmatprep.subr.mxu0 0.0
      %1195 = vmatpush1.msra.mxu0 0.0
      %1196 = vmatprep.subr.mxu0 %v1164
      %1197 = vmatpush1.msra.mxu0 %v1162
      %1198 = vmatprep.subr.mxu0 0.0
      %1199 = vmatpush2.msra.mxu0 0.0
      %1200 = vmatprep.subr.mxu0 0.0
      %1201 = vmatpush2.msra.mxu0 0.0
      %1202 = vmatprep.subr.mxu0 0.0
      %1203 = vmatpush2.msra.mxu0 0.0
      %1204 = vmatprep.subr.mxu0 0.0
      %1205 = vmatpush2.msra.mxu0 0.0
      %1206 = vmatprep.subr.mxu0 0.0
      %1207 = vmatpush2.msra.mxu0 0.0
      %1208 = vmatprep.subr.mxu0 0.0
      %1209 = vmatpush2.msra.mxu0 0.0
      %1210 = vmatprep.subr.mxu0 0.0
      %1211 = vmatpush2.msra.mxu0 0.0
      %1212 = vmatprep.subr.mxu0 0.0
      %1213 = vmatpush2.msra.mxu0 0.0
      %1214 = vmatprep.subr.mxu0 0.0
      %1215 = vmatpush2.msra.mxu0 0.0
      %1216 = vmatprep.subr.mxu0 0.0
      %1217 = vmatpush2.msra.mxu0 0.0
      %1218 = vmatprep.subr.mxu0 0.0
      %1219 = vmatpush2.msra.mxu0 0.0
      %1220 = vmatprep.subr.mxu0 0.0
      %1221 = vmatpush2.msra.mxu0 0.0
      %1222 = vmatprep.subr.mxu0 0.0
      %1223 = vmatpush2.msra.mxu0 0.0
      %1224 = vmatprep.subr.mxu0 0.0
      %1225 = vmatpush2.msra.mxu0 0.0
      %1226 = vmatprep.subr.mxu0 0.0
      %1227 = vmatpush2.msra.mxu0 0.0
      %1228 = vmatprep.subr.mxu0 0.0
      %1229 = vmatpush2.msra.mxu0 0.0
      %1230 = vmatprep.mubr.f32.mxu0 0.0
      %1231 = vmatmul.mubr.f32.gmra.mxu0 %v1160
      %v1232 = vpop.f32.mrf.mxu0
      %v1233 = vadd.f32 0.0, %v1232
      %v1234 = vpop.f32.mrf.mxu0
      %v1235 = vadd.f32 0.0, %v1234
      %1236 = vdwg.mxu0
      %v1237 = vadd.f32 %v1120, %v1233
      %v1238 = vadd.f32 %v1121, %v1235
      %1239 = vst [vmem:[%s204] sm:$0xff] %v1237
      %1240 = vst [vmem:[%s204 + $0x8] sm:$0xff] %v1238
      %v1241 = vadd.f32 %v1237, %v1238
      %1242 = vadd.xlane.f32.xlu0 %v1241
      %v1243 = vpop.xlane.xlu0 %1242
      %1244 = vst.msk [vmem:[%s208] sm:$0xff] %vm240, %v1243
      %v1245 = vmul.f32 %v1237, %v1237
      %v1246 = vmul.f32 %v1238, %v1238
      %v1247 = vadd.f32 %v1245, %v1246
      %1248 = vadd.xlane.f32.xlu0 %v1247
      %v1249 = vpop.xlane.xlu0 %1248
      %vm1250 = vcmask 15368
      %1251 = vst.msk [vmem:[%s208] sm:$0xff] %vm1250, %v1249
      %p1252 = scmp.lt.s32.totalorder %s16, 1
      %s1253 = scalar_select %p1252, %s16, 1
      %s1254 = smul.addr %s1253, 2
      %s1255 = smul.addr %s1254, 8
      %s1256 = scalar_lea.vmem %s3, %s1255
      %p1257 = scmp.lt.s32.totalorder %s16, 1
      %s1258 = scalar_select %p1257, %s16, 1
      %s1259 = smul.addr %s1258, 8
      %s1260 = scalar_lea.vmem %s4, %s1259
      // Predicated region
      $region33: #{block_forward.2} parent=31 // pred_check
        %p1261 = pneg %p102
      $region34: #{block_forward.2} parent=31 // pred_check_branch
        %1263 = sbr.rel (%p1261) target = $region36
      $region35: #{block_forward.2} parent=31 // pred_region
        _
      $region36: #{block_forward.2} parent=31 // pred_fallthru
        _
      // Predicated region
      $region37: #{block_forward.2} parent=31 // pred_check
        %p1264 = pneg %p128
      $region38: #{block_forward.2} parent=31 // pred_check_branch
        %1266 = sbr.rel (%p1264) target = $region40
      $region39: #{block_forward.2} parent=31 // pred_region
        _
      $region40: #{block_forward.2} parent=31 // pred_fallthru
        _
    $region32: #{block_forward.2} parent=5 // pred_fallthru
      _
    %p1267 = scmp.le.s32.totalorder 2, %s11
    // Predicated region
    $region41: #{block_forward.2} parent=5 // pred_check
      %p1268 = pneg %p1267
    $region42: #{block_forward.2} parent=5 // pred_check_branch
      %1270 = sbr.rel (%p1268) target = $region44
    $region43: #{block_forward.2} parent=5 // pred_region
      %s1271 = ssub.s32 %s11, 2
      // Predicated region
      $region45: #{block_forward.2} parent=43 // pred_check
        %p1272 = pneg %p108
      $region46: #{block_forward.2} parent=43 // pred_check_branch
        %1274 = sbr.rel (%p1272) target = $region48
      $region47: #{block_forward.2} parent=43 // pred_region
        %p1275 = scmp.lt.s32.totalorder %s17, 1
        %s1276 = scalar_select %p1275, %s17, 1
        %s1277 = smul.addr %s1276, 2
        %s1278 = smul.addr %s1277, 8
        %s1279 = scalar_lea.vmem %s3, %s1278
      $region48: #{block_forward.2} parent=43 // pred_fallthru
        _
      // Predicated region
      $region49: #{block_forward.2} parent=43 // pred_check
        %p1280 = pneg %p134
      $region50: #{block_forward.2} parent=43 // pred_check_branch
        %1282 = sbr.rel (%p1280) target = $region52
      $region51: #{block_forward.2} parent=43 // pred_region
        %p1283 = scmp.lt.s32.totalorder %s17, 1
        %s1284 = scalar_select %p1283, %s17, 1
        %s1285 = smul.addr %s1284, 8
        %s1286 = scalar_lea.vmem %s4, %s1285
      $region52: #{block_forward.2} parent=43 // pred_fallthru
        _
    $region44: #{block_forward.2} parent=5 // pred_fallthru
      _
  $region6: #{block_forward.2} parent=0 // loop_footer
    %s15 = sadd.s32 1, %s11
  $region7: #{block_forward.2} parent=0 // loop_footer_branch
    %10 = sbr.rel target = $region3
  $region8: #{block_forward.2} parent=0 // loop_exit
    _

</llo_original>
